<compile_context>
chip_gen: v7x
topology: tpu7x:2x2x1
jax: 0.10.0
libtpu: 0.0.40
codegen_flags: <defaults>
</compile_context>

<pallas_src>
import functools

import numpy as np
import jax
import jax.numpy as jnp
from jax.experimental import pallas as pl
from jax.experimental.pallas import tpu as pltpu  # noqa: F401  (kept for TPU-specific extensions)

# ----------------------------- config ---------------------------------------
CFG = dict(
    dim=32,
    resolution=8,
    num_heads=4,
    stripeWidth=4,
    mlp_ratio=4.0,
    qkv_bias=True,
    currentDepth=1,          # odd -> shifted windows + attention-mask path
)

LN_EPS = 1e-5


# ----------------------------- Pallas kernels -------------------------------
def _qkv_norm_kernel(x_ref, w_ref, b_ref, g_ref, beta_ref, o_ref):
    """y_i = x @ Wqkv_i + b_i, then norm1 LayerNorm on each of q/k/v."""
    x = x_ref[...]                                   # (M, C)
    g = g_ref[...]                                   # (1, C)
    be = beta_ref[...]                               # (1, C)
    for i in range(3):                               # static unroll: q, k, v
        y = jnp.dot(x, w_ref[i], preferred_element_type=jnp.float32) + b_ref[i]
        mu = jnp.mean(y, axis=-1, keepdims=True)
        var = jnp.mean((y - mu) ** 2, axis=-1, keepdims=True)
        o_ref[i] = ((y - mu) * jax.lax.rsqrt(var + LN_EPS) * g + be).astype(o_ref.dtype)


def pallas_qkv_norm(x, w3, b3, gamma, beta):
    """x: (M, C); w3: (3, C, C); b3: (3, C); gamma/beta: (C,) -> (3, M, C)."""
    M, C = x.shape
    return pl.pallas_call(
        _qkv_norm_kernel,
        out_shape=jax.ShapeDtypeStruct((3, M, C), jnp.float32),
    )(x, w3, b3.reshape(3, 1, C), gamma.reshape(1, C), beta.reshape(1, C))


def _attn_proj_kernel(q_ref, k_ref, v_ref, lepe_ref, *rest,
                      scale, B, nW, Hh, N, D, Cb, use_mask):
    if use_mask:
        mask_ref, pw_ref, pb_ref, o_ref = rest
    else:
        pw_ref, pb_ref, o_ref = rest
    G = B * nW * Hh

    q = q_ref[...] * scale                                         # (G, N, D)
    attn = jnp.einsum('gnd,gmd->gnm', q, k_ref[...],
                      preferred_element_type=jnp.float32)          # (G, N, N)
    if use_mask:
        m = mask_ref[...]                                          # (nW, N, N)
        m = jnp.broadcast_to(m[None, :, None], (B, nW, Hh, N, N)).reshape(G, N, N)
        attn = attn + m
    attn = attn - jnp.max(attn, axis=-1, keepdims=True)
    p = jnp.exp(attn)
    p = p * pl.reciprocal(jnp.sum(p, axis=-1, keepdims=True), approx=True)

    out = jnp.einsum('gnm,gmd->gnd', p, v_ref[...],
                     preferred_element_type=jnp.float32)
    out = out + lepe_ref[...]                                      # (G, N, D)

    # Fused output projection.  After PyTorch's transpose(1,2).reshape(-1,N,C)
    # the channel layout is head-major (c = h*D + d), so project head-by-head
    # against the matching row block of proj_w and accumulate.
    out = out.reshape(B * nW, Hh, N, D)
    acc = jnp.broadcast_to(pb_ref[...].reshape(1, 1, Cb), (B * nW, N, Cb))
    for h in range(Hh):                                            # static unroll
        oh = out[:, h]                                             # (B*nW, N, D)
        wh = pw_ref[h * D:(h + 1) * D, :]                          # (D, Cb)
        whb = jnp.broadcast_to(wh[None], (B * nW, D, Cb))
        acc = acc + jnp.einsum('wnd,wdc->wnc', oh, whb,
                               preferred_element_type=jnp.float32)
    o_ref[...] = acc.astype(o_ref.dtype)


def pallas_window_attention_proj(q, k, v, lepe, mask, proj_w, proj_b, scale, B, nW):
    """q/k/v/lepe: (B*nW, Hh, N, D); mask: (nW, N, N) or None.

    Returns (B*nW, N, Hh*D): attention + LePE + output projection fused in a
    single kernel invocation (no grid) for all batches / windows / heads.
    """
    BW, Hh, N, D = q.shape
    Cb = Hh * D
    G = BW * Hh
    qf = q.reshape(G, N, D)
    kf = k.reshape(G, N, D)
    vf = v.reshape(G, N, D)
    lf = lepe.reshape(G, N, D)

    use_mask = mask is not None
    kernel = functools.partial(
        _attn_proj_kernel, scale=float(scale), B=B, nW=nW, Hh=Hh, N=N, D=D,
        Cb=Cb, use_mask=use_mask)
    args = [qf, kf, vf, lf]
    if use_mask:
        args.append(mask)
    args += [proj_w, proj_b.reshape(1, Cb)]
    return pl.pallas_call(
        kernel,
        out_shape=jax.ShapeDtypeStruct((BW, N, Cb), jnp.float32),
    )(*args)


def _mlp_kernel(x_ref, g_ref, beta_ref, w1_ref, b1_ref, w2_ref, b2_ref, o_ref):
    """norm2 LayerNorm + Linear -> GELU -> Linear, fused in one kernel."""
    x = x_ref[...]
    mu = jnp.mean(x, axis=-1, keepdims=True)
    var = jnp.mean((x - mu) ** 2, axis=-1, keepdims=True)
    y = (x - mu) * jax.lax.rsqrt(var + LN_EPS) * g_ref[...] + beta_ref[...]
    h = jnp.dot(y, w1_ref[...], preferred_element_type=jnp.float32) + b1_ref[...]
    # TODO(synk): Mlp class not provided in source; using Linear->GELU->Linear.
    h = jax.nn.gelu(h)
    o = jnp.dot(h, w2_ref[...], preferred_element_type=jnp.float32) + b2_ref[...]
    o_ref[...] = o.astype(o_ref.dtype)


def pallas_mlp(x, gamma, beta, w1, b1, w2, b2):
    M, C = x.shape
    H = w1.shape[1]
    return pl.pallas_call(
        _mlp_kernel,
        out_shape=jax.ShapeDtypeStruct((M, C), jnp.float32),
    )(x, gamma.reshape(1, C), beta.reshape(1, C),
      w1, b1.reshape(1, H), w2, b2.reshape(1, C))


# ----------------------------- plain-JAX glue --------------------------------
def depthwise_conv3x3(x, w, b):
    # x: (Nw, C, H, W), w: (C, 1, 3, 3), b: (C,)   -- matches nn.Conv2d(groups=C)
    out = jax.lax.conv_general_dilated(
        x, w, window_strides=(1, 1), padding=((1, 1), (1, 1)),
        dimension_numbers=("NCHW", "OIHW", "NCHW"),
        feature_group_count=x.shape[1])
    return out + b[None, :, None, None]


def seq2cswin(x, res, wH, wW, heads):
    B, L, C = x.shape
    x = jnp.transpose(x, (0, 2, 1)).reshape(B, C, res, res)
    x = x.reshape(B, C, res // wH, wH, res // wW, wW)
    x = jnp.transpose(x, (0, 2, 4, 3, 5, 1)).reshape(-1, wH * wW, C)
    x = x.reshape(-1, wH * wW, heads, C // heads)
    return jnp.transpose(x, (0, 2, 1, 3))                   # (B*nW, heads, N, hd)


def get_lepe(x, res, wH, wW, heads, conv_w, conv_b):
    B, L, C = x.shape
    x = jnp.transpose(x, (0, 2, 1)).reshape(B, C, res, res)
    x = x.reshape(B, C, res // wH, wH, res // wW, wW)
    x = jnp.transpose(x, (0, 2, 4, 1, 3, 5)).reshape(-1, C, wH, wW)
    lepe = depthwise_conv3x3(x, conv_w, conv_b)
    lepe = lepe.reshape(-1, heads, C // heads, wH * wW)
    lepe = jnp.transpose(lepe, (0, 1, 3, 2))
    xv = x.reshape(-1, heads, C // heads, wH * wW)
    xv = jnp.transpose(xv, (0, 1, 3, 2))
    return xv, lepe                                         # both (B*nW, heads, N, hd)


def cswin2img(x, wH, wW, res):
    B = x.shape[0] // (res * res // (wH * wW))
    x = x.reshape(B, res // wH, res // wW, wH, wW, -1)
    x = jnp.transpose(x, (0, 1, 3, 2, 4, 5)).reshape(B, res, res, -1)
    return x


def vertical_mask(res, stripe):
    shift = stripe // 2
    img = np.zeros((1, res, res, 1), np.float32)
    img[:, :, res - stripe:res - shift, :] = 1.0
    img[:, :, res - shift:, :] = 2.0
    mw = img.reshape(1, 1, res, res // stripe, stripe, 1)
    mw = mw.transpose(0, 1, 3, 2, 4, 5).reshape(-1, res * stripe)
    m = mw[:, None, :] - mw[:, :, None]
    return np.where(m != 0, -100.0, 0.0).astype(np.float32)   # (nW, N, N)


def horizontal_mask(res, stripe):
    shift = stripe // 2
    img = np.zeros((1, res, res, 1), np.float32)
    img[:, res - stripe:res - shift, :, :] = 1.0
    img[:, res - shift:, :, :] = 2.0
    mw = img.reshape(1, res // stripe, stripe, 1, res, 1)
    mw = mw.transpose(0, 1, 3, 2, 4, 5).reshape(-1, stripe * res)
    m = mw[:, None, :] - mw[:, :, None]
    return np.where(m != 0, -100.0, 0.0).astype(np.float32)   # (nW, N, N)


def attention_branch(qkv, p, mode, cfg, B):
    res, stripe = cfg["resolution"], cfg["stripeWidth"]
    heads = cfg["num_heads"] // 2
    q, k, v = qkv[0], qkv[1], qkv[2]                        # (B, L, Cb)
    Cb = q.shape[-1]
    wH, wW = (res, stripe) if mode == 0 else (stripe, res)
    nW = (res // wH) * (res // wW)

    qw = seq2cswin(q, res, wH, wW, heads)
    kw = seq2cswin(k, res, wH, wW, heads)
    vw, lepe = get_lepe(v, res, wH, wW, heads, p["conv_w"], p["conv_b"])

    if cfg["currentDepth"] % 2 == 1:
        # Only nW unique (N, N) mask tiles; broadcast over batch/heads in-kernel.
        m = vertical_mask(res, stripe) if mode == 0 else horizontal_mask(res, stripe)
        mask = jnp.asarray(m)
    else:
        mask = None                       # even depth: mask-free kernel variant

    out = pallas_window_attention_proj(
        qw, kw, vw, lepe, mask, p["proj_w"], p["proj_b"], p["scale"], B, nW)
    img = cswin2img(out, wH, wW, res)                       # (B, res, res, Cb)
    return img.reshape(B, -1, Cb)


def forward(x, params, cfg):
    B, L, C = x.shape
    res, stripe = cfg["resolution"], cfg["stripeWidth"]
    shift = stripe // 2
    # TODO(synk): the no_cross_stripes (resolution == stripeWidth) single-branch
    # path of the PyTorch module is not exercised by this config.
    assert res != stripe
    shifted = (cfg["currentDepth"] % 2 == 1)

    # Fused qkv projection + norm1 (per-token LayerNorm commutes with the roll).
    qkv = pallas_qkv_norm(x.reshape(B * L, C), params["qkv_w"], params["qkv_b"],
                          params["norm1_g"], params["norm1_b"])
    qkv = qkv.reshape(3, B, L, C)

    if shifted:
        qkv = qkv.reshape(3, B, res, res, C)
        qkv = jnp.roll(qkv, shift=(-shift, -shift), axis=(2, 3))
        qkv = qkv.reshape(3, B, L, C)

    half = C // 2
    a0 = attention_branch(qkv[..., :half], params["attn0"], 0, cfg, B)
    a1 = attention_branch(qkv[..., half:], params["attn1"], 1, cfg, B)
    attened = jnp.concatenate([a0, a1], axis=2)             # (B, L, C)

    if shifted:
        attened = attened.reshape(B, res, res, C)
        attened = jnp.roll(attened, shift=(shift, shift), axis=(1, 2))
        attened = attened.reshape(B, L, C)

    x = x + attened                                          # drop_path = identity
    mlp_out = pallas_mlp(x.reshape(B * L, C),
                         params["norm2_g"], params["norm2_b"],
                         params["mlp_w1"], params["mlp_b1"],
                         params["mlp_w2"], params["mlp_b2"])
    x = x + mlp_out.reshape(B, L, C)
    return x


# ----------------------------- parameters ------------------------------------
def init_params(key, cfg):
    dim = cfg["dim"]
    hidden = int(dim * cfg["mlp_ratio"])
    dim_b = dim // 2
    heads_b = cfg["num_heads"] // 2
    hd = dim_b // heads_b
    keys = jax.random.split(key, 8)

    def lin(k, din, dout):
        return (jax.random.normal(k, (din, dout), jnp.float32) * 0.02,
                jnp.zeros((dout,), jnp.float32))

    def branch(k):
        k1, k2 = jax.random.split(k)
        pw, pb = lin(k1, dim_b, dim_b)
        cw = jax.random.normal(k2, (dim_b, 1, 3, 3), jnp.float32) * 0.02
        return dict(
            # learnable 1-elem scalar in torch (init = head_dim**-0.5); folded
            # as a compile-time constant into the attention kernel.
            scale=float(hd ** (-0.5)),
            proj_w=pw, proj_b=pb,
            conv_w=cw, conv_b=jnp.zeros((dim_b,), jnp.float32),
        )

    # qkv weight stored pre-split per q/k/v: (3, dim, dim) / (3, dim)
    qkv_w = jax.random.normal(keys[0], (3, dim, dim), jnp.float32) * 0.02
    qkv_b = jnp.zeros((3, dim), jnp.float32)
    w1, b1 = lin(keys[1], dim, hidden)
    w2, b2 = lin(keys[2], hidden, dim)
    return dict(
        qkv_w=qkv_w, qkv_b=qkv_b,
        norm1_g=jnp.ones((dim,), jnp.float32), norm1_b=jnp.zeros((dim,), jnp.float32),
        norm2_g=jnp.ones((dim,), jnp.float32), norm2_b=jnp.zeros((dim,), jnp.float32),
        attn0=branch(keys[3]), attn1=branch(keys[4]),
        mlp_w1=w1, mlp_b1=b1, mlp_w2=w2, mlp_b2=b2,
    )


# ----------------------------- main -------------------------------------------
if __name__ == "__main__":
    key = jax.random.PRNGKey(0)
    kx, kp = jax.random.split(key)
    B = 2
    L = CFG["resolution"] ** 2
    C = CFG["dim"]
    x = jax.random.normal(kx, (B, L, C), jnp.float32)
    params = init_params(kp, CFG)

    out = forward(x, params, CFG)
    out = jax.block_until_ready(out)
    assert out.shape == (B, L, C)
    assert bool(jnp.all(jnp.isfinite(out)))
    print("KERNEL_OK")
</pallas_src>

<mosaic_0001>
module attributes {stable_mosaic.version = 11 : i64} {
  func.func @_qkv_norm_kernel(%arg0: memref<128x32xf32, #tpu.memory_space<vmem>>, %arg1: memref<3x32x32xf32, #tpu.memory_space<vmem>>, %arg2: memref<3x1x32xf32, #tpu.memory_space<vmem>>, %arg3: memref<1x32xf32, #tpu.memory_space<vmem>>, %arg4: memref<1x32xf32, #tpu.memory_space<vmem>>, %arg5: memref<3x128x32xf32, #tpu.memory_space<vmem>>) attributes {dimension_semantics = [], scalar_prefetch = 0 : i64, scratch_operands = 0 : i64, tpu.core_type = #tpu.core_type<tc>} {
    %c0 = arith.constant 0 : index
    %c0_0 = arith.constant 0 : index
    %0 = vector.load %arg0[%c0, %c0_0] : memref<128x32xf32, #tpu.memory_space<vmem>>, vector<128x32xf32>
    %c0_1 = arith.constant 0 : index
    %c0_2 = arith.constant 0 : index
    %1 = vector.load %arg3[%c0_1, %c0_2] : memref<1x32xf32, #tpu.memory_space<vmem>>, vector<1x32xf32>
    %c0_3 = arith.constant 0 : index
    %c0_4 = arith.constant 0 : index
    %2 = vector.load %arg4[%c0_3, %c0_4] : memref<1x32xf32, #tpu.memory_space<vmem>>, vector<1x32xf32>
    %c0_5 = arith.constant 0 : index
    %c0_6 = arith.constant 0 : index
    %c0_7 = arith.constant 0 : index
    %3 = vector.load %arg1[%c0_5, %c0_6, %c0_7] : memref<3x32x32xf32, #tpu.memory_space<vmem>>, vector<1x32x32xf32>
    %4 = vector.shape_cast %3 : vector<1x32x32xf32> to vector<32x32xf32>
    %cst = arith.constant dense<0.000000e+00> : vector<128x32xf32>
    %5 = tpu.matmul %0, %4, %cst {dimension_numbers = #tpu.dot_dimension_numbers<[1], [0], [0], [1], [0, 0, 1, 1], [], []>} : vector<128x32xf32>, vector<32x32xf32>, vector<128x32xf32> -> vector<128x32xf32>
    %c0_8 = arith.constant 0 : index
    %c0_9 = arith.constant 0 : index
    %c0_10 = arith.constant 0 : index
    %6 = vector.load %arg2[%c0_8, %c0_9, %c0_10] : memref<3x1x32xf32, #tpu.memory_space<vmem>>, vector<1x1x32xf32>
    %7 = vector.shape_cast %6 : vector<1x1x32xf32> to vector<1x32xf32>
    %8 = vector.broadcast %7 : vector<1x32xf32> to vector<128x32xf32>
    %9 = arith.addf %5, %8 : vector<128x32xf32>
    %cst_11 = arith.constant dense<0.000000e+00> : vector<128xf32>
    %10 = vector.multi_reduction <add>, %9, %cst_11 [1] : vector<128x32xf32> to vector<128xf32>
    %11 = vector.shape_cast %10 : vector<128xf32> to vector<128x1xf32>
    %cst_12 = arith.constant 3.200000e+01 : f32
    %12 = vector.broadcast %cst_12 : f32 to vector<128x1xf32>
    %13 = arith.divf %11, %12 : vector<128x1xf32>
    %14 = vector.broadcast %13 : vector<128x1xf32> to vector<128x32xf32>
    %15 = arith.subf %9, %14 : vector<128x32xf32>
    %16 = arith.mulf %15, %15 : vector<128x32xf32>
    %cst_13 = arith.constant dense<0.000000e+00> : vector<128xf32>
    %17 = vector.multi_reduction <add>, %16, %cst_13 [1] : vector<128x32xf32> to vector<128xf32>
    %18 = vector.shape_cast %17 : vector<128xf32> to vector<128x1xf32>
    %cst_14 = arith.constant 3.200000e+01 : f32
    %19 = vector.broadcast %cst_14 : f32 to vector<128x1xf32>
    %20 = arith.divf %18, %19 : vector<128x1xf32>
    %21 = vector.broadcast %13 : vector<128x1xf32> to vector<128x32xf32>
    %22 = arith.subf %9, %21 : vector<128x32xf32>
    %cst_15 = arith.constant 9.99999974E-6 : f32
    %23 = vector.broadcast %cst_15 : f32 to vector<128x1xf32>
    %24 = arith.addf %20, %23 : vector<128x1xf32>
    %25 = math.rsqrt %24 : vector<128x1xf32>
    %26 = vector.broadcast %25 : vector<128x1xf32> to vector<128x32xf32>
    %27 = arith.mulf %22, %26 : vector<128x32xf32>
    %28 = vector.broadcast %1 : vector<1x32xf32> to vector<128x32xf32>
    %29 = arith.mulf %27, %28 : vector<128x32xf32>
    %30 = vector.broadcast %2 : vector<1x32xf32> to vector<128x32xf32>
    %31 = arith.addf %29, %30 : vector<128x32xf32>
    %c0_16 = arith.constant 0 : index
    %c0_17 = arith.constant 0 : index
    %c0_18 = arith.constant 0 : index
    %32 = vector.load %arg5[%c0_16, %c0_17, %c0_18] : memref<3x128x32xf32, #tpu.memory_space<vmem>>, vector<1x128x32xf32>
    %33 = vector.shape_cast %32 : vector<1x128x32xf32> to vector<128x32xf32>
    %34 = vector.shape_cast %31 : vector<128x32xf32> to vector<1x128x32xf32>
    tpu.vector_store %arg5[%c0_16, %c0_17, %c0_18], %34 {strides = array<i32>} : memref<3x128x32xf32, #tpu.memory_space<vmem>>, vector<1x128x32xf32>,
    %c1 = arith.constant 1 : index
    %c0_19 = arith.constant 0 : index
    %c0_20 = arith.constant 0 : index
    %35 = vector.load %arg1[%c1, %c0_19, %c0_20] : memref<3x32x32xf32, #tpu.memory_space<vmem>>, vector<1x32x32xf32>
    %36 = vector.shape_cast %35 : vector<1x32x32xf32> to vector<32x32xf32>
    %cst_21 = arith.constant dense<0.000000e+00> : vector<128x32xf32>
    %37 = tpu.matmul %0, %36, %cst_21 {dimension_numbers = #tpu.dot_dimension_numbers<[1], [0], [0], [1], [0, 0, 1, 1], [], []>} : vector<128x32xf32>, vector<32x32xf32>, vector<128x32xf32> -> vector<128x32xf32>
    %c1_22 = arith.constant 1 : index
    %c0_23 = arith.constant 0 : index
    %c0_24 = arith.constant 0 : index
    %38 = vector.load %arg2[%c1_22, %c0_23, %c0_24] : memref<3x1x32xf32, #tpu.memory_space<vmem>>, vector<1x1x32xf32>
    %39 = vector.shape_cast %38 : vector<1x1x32xf32> to vector<1x32xf32>
    %40 = vector.broadcast %39 : vector<1x32xf32> to vector<128x32xf32>
    %41 = arith.addf %37, %40 : vector<128x32xf32>
    %cst_25 = arith.constant dense<0.000000e+00> : vector<128xf32>
    %42 = vector.multi_reduction <add>, %41, %cst_25 [1] : vector<128x32xf32> to vector<128xf32>
    %43 = vector.shape_cast %42 : vector<128xf32> to vector<128x1xf32>
    %cst_26 = arith.constant 3.200000e+01 : f32
    %44 = vector.broadcast %cst_26 : f32 to vector<128x1xf32>
    %45 = arith.divf %43, %44 : vector<128x1xf32>
    %46 = vector.broadcast %45 : vector<128x1xf32> to vector<128x32xf32>
    %47 = arith.subf %41, %46 : vector<128x32xf32>
    %48 = arith.mulf %47, %47 : vector<128x32xf32>
    %cst_27 = arith.constant dense<0.000000e+00> : vector<128xf32>
    %49 = vector.multi_reduction <add>, %48, %cst_27 [1] : vector<128x32xf32> to vector<128xf32>
    %50 = vector.shape_cast %49 : vector<128xf32> to vector<128x1xf32>
    %cst_28 = arith.constant 3.200000e+01 : f32
    %51 = vector.broadcast %cst_28 : f32 to vector<128x1xf32>
    %52 = arith.divf %50, %51 : vector<128x1xf32>
    %53 = vector.broadcast %45 : vector<128x1xf32> to vector<128x32xf32>
    %54 = arith.subf %41, %53 : vector<128x32xf32>
    %cst_29 = arith.constant 9.99999974E-6 : f32
    %55 = vector.broadcast %cst_29 : f32 to vector<128x1xf32>
    %56 = arith.addf %52, %55 : vector<128x1xf32>
    %57 = math.rsqrt %56 : vector<128x1xf32>
    %58 = vector.broadcast %57 : vector<128x1xf32> to vector<128x32xf32>
    %59 = arith.mulf %54, %58 : vector<128x32xf32>
    %60 = vector.broadcast %1 : vector<1x32xf32> to vector<128x32xf32>
    %61 = arith.mulf %59, %60 : vector<128x32xf32>
    %62 = vector.broadcast %2 : vector<1x32xf32> to vector<128x32xf32>
    %63 = arith.addf %61, %62 : vector<128x32xf32>
    %c1_30 = arith.constant 1 : index
    %c0_31 = arith.constant 0 : index
    %c0_32 = arith.constant 0 : index
    %64 = vector.load %arg5[%c1_30, %c0_31, %c0_32] : memref<3x128x32xf32, #tpu.memory_space<vmem>>, vector<1x128x32xf32>
    %65 = vector.shape_cast %64 : vector<1x128x32xf32> to vector<128x32xf32>
    %66 = vector.shape_cast %63 : vector<128x32xf32> to vector<1x128x32xf32>
    tpu.vector_store %arg5[%c1_30, %c0_31, %c0_32], %66 {strides = array<i32>} : memref<3x128x32xf32, #tpu.memory_space<vmem>>, vector<1x128x32xf32>,
    %c2 = arith.constant 2 : index
    %c0_33 = arith.constant 0 : index
    %c0_34 = arith.constant 0 : index
    %67 = vector.load %arg1[%c2, %c0_33, %c0_34] : memref<3x32x32xf32, #tpu.memory_space<vmem>>, vector<1x32x32xf32>
    %68 = vector.shape_cast %67 : vector<1x32x32xf32> to vector<32x32xf32>
    %cst_35 = arith.constant dense<0.000000e+00> : vector<128x32xf32>
    %69 = tpu.matmul %0, %68, %cst_35 {dimension_numbers = #tpu.dot_dimension_numbers<[1], [0], [0], [1], [0, 0, 1, 1], [], []>} : vector<128x32xf32>, vector<32x32xf32>, vector<128x32xf32> -> vector<128x32xf32>
    %c2_36 = arith.constant 2 : index
    %c0_37 = arith.constant 0 : index
    %c0_38 = arith.constant 0 : index
    %70 = vector.load %arg2[%c2_36, %c0_37, %c0_38] : memref<3x1x32xf32, #tpu.memory_space<vmem>>, vector<1x1x32xf32>
    %71 = vector.shape_cast %70 : vector<1x1x32xf32> to vector<1x32xf32>
    %72 = vector.broadcast %71 : vector<1x32xf32> to vector<128x32xf32>
    %73 = arith.addf %69, %72 : vector<128x32xf32>
    %cst_39 = arith.constant dense<0.000000e+00> : vector<128xf32>
    %74 = vector.multi_reduction <add>, %73, %cst_39 [1] : vector<128x32xf32> to vector<128xf32>
    %75 = vector.shape_cast %74 : vector<128xf32> to vector<128x1xf32>
    %cst_40 = arith.constant 3.200000e+01 : f32
    %76 = vector.broadcast %cst_40 : f32 to vector<128x1xf32>
    %77 = arith.divf %75, %76 : vector<128x1xf32>
    %78 = vector.broadcast %77 : vector<128x1xf32> to vector<128x32xf32>
    %79 = arith.subf %73, %78 : vector<128x32xf32>
    %80 = arith.mulf %79, %79 : vector<128x32xf32>
    %cst_41 = arith.constant dense<0.000000e+00> : vector<128xf32>
    %81 = vector.multi_reduction <add>, %80, %cst_41 [1] : vector<128x32xf32> to vector<128xf32>
    %82 = vector.shape_cast %81 : vector<128xf32> to vector<128x1xf32>
    %cst_42 = arith.constant 3.200000e+01 : f32
    %83 = vector.broadcast %cst_42 : f32 to vector<128x1xf32>
    %84 = arith.divf %82, %83 : vector<128x1xf32>
    %85 = vector.broadcast %77 : vector<128x1xf32> to vector<128x32xf32>
    %86 = arith.subf %73, %85 : vector<128x32xf32>
    %cst_43 = arith.constant 9.99999974E-6 : f32
    %87 = vector.broadcast %cst_43 : f32 to vector<128x1xf32>
    %88 = arith.addf %84, %87 : vector<128x1xf32>
    %89 = math.rsqrt %88 : vector<128x1xf32>
    %90 = vector.broadcast %89 : vector<128x1xf32> to vector<128x32xf32>
    %91 = arith.mulf %86, %90 : vector<128x32xf32>
    %92 = vector.broadcast %1 : vector<1x32xf32> to vector<128x32xf32>
    %93 = arith.mulf %91, %92 : vector<128x32xf32>
    %94 = vector.broadcast %2 : vector<1x32xf32> to vector<128x32xf32>
    %95 = arith.addf %93, %94 : vector<128x32xf32>
    %c2_44 = arith.constant 2 : index
    %c0_45 = arith.constant 0 : index
    %c0_46 = arith.constant 0 : index
    %96 = vector.load %arg5[%c2_44, %c0_45, %c0_46] : memref<3x128x32xf32, #tpu.memory_space<vmem>>, vector<1x128x32xf32>
    %97 = vector.shape_cast %96 : vector<1x128x32xf32> to vector<128x32xf32>
    %98 = vector.shape_cast %95 : vector<128x32xf32> to vector<1x128x32xf32>
    tpu.vector_store %arg5[%c2_44, %c0_45, %c0_46], %98 {strides = array<i32>} : memref<3x128x32xf32, #tpu.memory_space<vmem>>, vector<1x128x32xf32>,
    return
  }
}

</mosaic_0001>

<llo_original>
// kernel: tpu_custom_call.1
$region0: #{tpu_custom_call.1}
  #allocation0 [shape = 'u32[]', space=smem, size = 0x4, offset = 0x4, fixed_abs, tag = 'smem constant byte address 0x4 - core index']
  #allocation1 [shape = 'u32[144,128]{1,0:T(1,128)}', space=vmem, size = 0x12000, scoped, tag = 'internal scratch']
  %s0 = inlined_call_operand.vmem [shape: f32[128,32], index: 0, kind: input, shape index: {}]
  %s1 = inlined_call_operand.vmem [shape: f32[3,32,32], index: 1, kind: input, shape index: {}]
  %s2 = inlined_call_operand.vmem [shape: f32[3,1,32], index: 2, kind: input, shape index: {}]
  %s3 = inlined_call_operand.vmem [shape: f32[1,32], index: 3, kind: input, shape index: {}]
  %s4 = inlined_call_operand.vmem [shape: f32[1,32], index: 4, kind: input, shape index: {}]
  %s5 = inlined_call_operand.vmem [shape: f32[3,128,32], index: 5, kind: output, shape index: {}]
  %s6 = sld [smem:[#allocation0]]
  $region30: #{tpu_custom_call.1} parent=0
    _
  %s8 = ssub.s32 1, %s6
  %s9 = scalar_select 0, %s8, %s6
  // Predicated region
  $region2: #{tpu_custom_call.1} parent=0 // pred_check
    _
  $region3: #{tpu_custom_call.1} parent=0 // pred_check_branch
    %11 = sbr.rel (0) target = $region5
  $region4: #{tpu_custom_call.1} parent=0 // pred_region
    _
  $region5: #{tpu_custom_call.1} parent=0 // pred_fallthru
    _
  // Predicated region
  $region6: #{tpu_custom_call.1} parent=0 // pred_check
    _
  $region7: #{tpu_custom_call.1} parent=0 // pred_check_branch
    %13 = sbr.rel (0) target = $region9
  $region8: #{tpu_custom_call.1} parent=0 // pred_region
    _
  $region9: #{tpu_custom_call.1} parent=0 // pred_fallthru
    _
  // Predicated region
  $region10: #{tpu_custom_call.1} parent=0 // pred_check
    _
  $region11: #{tpu_custom_call.1} parent=0 // pred_check_branch
    %15 = sbr.rel (0) target = $region13
  $region12: #{tpu_custom_call.1} parent=0 // pred_region
    _
  $region13: #{tpu_custom_call.1} parent=0 // pred_fallthru
    _
  // Predicated region
  $region14: #{tpu_custom_call.1} parent=0 // pred_check
    _
  $region15: #{tpu_custom_call.1} parent=0 // pred_check_branch
    %17 = sbr.rel (0) target = $region17
  $region16: #{tpu_custom_call.1} parent=0 // pred_region
    _
  $region17: #{tpu_custom_call.1} parent=0 // pred_fallthru
    _
  // Predicated region
  $region18: #{tpu_custom_call.1} parent=0 // pred_check
    _
  $region19: #{tpu_custom_call.1} parent=0 // pred_check_branch
    %19 = sbr.rel (0) target = $region21
  $region20: #{tpu_custom_call.1} parent=0 // pred_region
    _
  $region21: #{tpu_custom_call.1} parent=0 // pred_fallthru
    _
  %v20 = vld [vmem:[%s0] sm:$0xff]
  %v21 = vld [vmem:[%s0 + $0x8] sm:$0xff]
  %v22 = vld [vmem:[%s0 + $0x10] sm:$0xff]
  %v23 = vld [vmem:[%s0 + $0x18] sm:$0xff]
  %v24 = vld [vmem:[%s0 + $0x20] sm:$0xff]
  %v25 = vld [vmem:[%s0 + $0x28] sm:$0xff]
  %v26 = vld [vmem:[%s0 + $0x30] sm:$0xff]
  %v27 = vld [vmem:[%s0 + $0x38] sm:$0xff]
  %v28 = vld [vmem:[%s0 + $0x40] sm:$0xff]
  %v29 = vld [vmem:[%s0 + $0x48] sm:$0xff]
  %v30 = vld [vmem:[%s0 + $0x50] sm:$0xff]
  %v31 = vld [vmem:[%s0 + $0x58] sm:$0xff]
  %v32 = vld [vmem:[%s0 + $0x60] sm:$0xff]
  %v33 = vld [vmem:[%s0 + $0x68] sm:$0xff]
  %v34 = vld [vmem:[%s0 + $0x70] sm:$0xff]
  %v35 = vld [vmem:[%s0 + $0x78] sm:$0xff]
  %v36 = vld [vmem:[%s3] sm:$0x1]
  %v37 = vld [vmem:[%s4] sm:$0x1]
  %v38 = vld [vmem:[%s1] sm:$0xff]
  %v39 = vld [vmem:[%s1 + $0x8] sm:$0xff]
  %v40 = vld [vmem:[%s1 + $0x10] sm:$0xff]
  %v41 = vld [vmem:[%s1 + $0x18] sm:$0xff]
  %v42 = vld [vmem:[%s2] sm:$0x1]
  %v44 = vlaneseq
  %v45 = vshrl.u32 %v44, 7
  %v46 = vsub.s32 0, %v45
  %v47 = vrot.slane %v42, %v46
  %vm49 = vcmask 261120
  %v51 = vsel %vm49, %v20, 0
  %v54 = vsel %vm49, %v21, 0
  %v57 = vsel %vm49, %v22, 0
  %v60 = vsel %vm49, %v23, 0
  %v63 = vsel %vm49, %v24, 0
  %v66 = vsel %vm49, %v25, 0
  %v69 = vsel %vm49, %v26, 0
  %v72 = vsel %vm49, %v27, 0
  %v75 = vsel %vm49, %v28, 0
  %v78 = vsel %vm49, %v29, 0
  %v81 = vsel %vm49, %v30, 0
  %v84 = vsel %vm49, %v31, 0
  %v87 = vsel %vm49, %v32, 0
  %v90 = vsel %vm49, %v33, 0
  %v93 = vsel %vm49, %v34, 0
  %v96 = vsel %vm49, %v35, 0
  %98 = vmatprep.subr.mxu0 0.0
  %99 = vmatpush1.msra.mxu0 %v38
  %100 = vmatprep.subr.mxu0 0.0
  %101 = vmatpush1.msra.mxu0 %v39
  %102 = vmatprep.subr.mxu0 0.0
  %103 = vmatpush1.msra.mxu0 %v40
  %104 = vmatprep.subr.mxu0 0.0
  %105 = vmatpush1.msra.mxu0 %v41
  %106 = vmatprep.subr.mxu0 0.0
  %107 = vmatpush1.msra.mxu0 0.0
  %108 = vmatprep.subr.mxu0 0.0
  %109 = vmatpush1.msra.mxu0 0.0
  %110 = vmatprep.subr.mxu0 0.0
  %111 = vmatpush1.msra.mxu0 0.0
  %112 = vmatprep.subr.mxu0 0.0
  %113 = vmatpush1.msra.mxu0 0.0
  %114 = vmatprep.subr.mxu0 0.0
  %115 = vmatpush1.msra.mxu0 0.0
  %116 = vmatprep.subr.mxu0 0.0
  %117 = vmatpush1.msra.mxu0 0.0
  %118 = vmatprep.subr.mxu0 0.0
  %119 = vmatpush1.msra.mxu0 0.0
  %120 = vmatprep.subr.mxu0 0.0
  %121 = vmatpush1.msra.mxu0 0.0
  %122 = vmatprep.subr.mxu0 0.0
  %123 = vmatpush1.msra.mxu0 0.0
  %124 = vmatprep.subr.mxu0 0.0
  %125 = vmatpush1.msra.mxu0 0.0
  %126 = vmatprep.subr.mxu0 0.0
  %127 = vmatpush1.msra.mxu0 0.0
  %128 = vmatprep.subr.mxu0 0.0
  %129 = vmatpush1.msra.mxu0 0.0
  %130 = vmatprep.subr.mxu0 0.0
  %131 = vmatpush1.msra.mxu0 0.0
  %132 = vmatprep.subr.mxu0 0.0
  %133 = vmatpush1.msra.mxu0 0.0
  %134 = vmatprep.subr.mxu0 0.0
  %135 = vmatpush1.msra.mxu0 0.0
  %136 = vmatprep.subr.mxu0 0.0
  %137 = vmatpush1.msra.mxu0 0.0
  %138 = vmatprep.subr.mxu0 0.0
  %139 = vmatpush1.msra.mxu0 0.0
  %140 = vmatprep.subr.mxu0 0.0
  %141 = vmatpush1.msra.mxu0 0.0
  %142 = vmatprep.subr.mxu0 0.0
  %143 = vmatpush1.msra.mxu0 0.0
  %144 = vmatprep.subr.mxu0 0.0
  %145 = vmatpush1.msra.mxu0 0.0
  %146 = vmatprep.subr.mxu0 0.0
  %147 = vmatpush1.msra.mxu0 0.0
  %148 = vmatprep.subr.mxu0 0.0
  %149 = vmatpush1.msra.mxu0 0.0
  %150 = vmatprep.subr.mxu0 0.0
  %151 = vmatpush1.msra.mxu0 0.0
  %152 = vmatprep.subr.mxu0 0.0
  %153 = vmatpush1.msra.mxu0 0.0
  %154 = vmatprep.subr.mxu0 0.0
  %155 = vmatpush1.msra.mxu0 0.0
  %156 = vmatprep.subr.mxu0 0.0
  %157 = vmatpush1.msra.mxu0 0.0
  %158 = vmatprep.subr.mxu0 0.0
  %159 = vmatpush1.msra.mxu0 0.0
  %160 = vmatprep.subr.mxu0 0.0
  %161 = vmatpush1.msra.mxu0 0.0
  %162 = vmatprep.mubr.f32.mxu0 0.0
  %163 = vmatmul.mubr.f32.gmra.mrb[0].mxu0 %v51
  %v164 = vpop.f32.mrb[0].mxu0
  %v165 = vadd.f32 %v47, %v164
  %v166 = vpop.f32.mrb[0].mxu0
  %167 = vmatprep.mubr.f32.mxu0 0.0
  %168 = vmatmul.mubr.f32.gmra.mrb[0].mxu0 %v54
  %v169 = vpop.f32.mrb[0].mxu0
  %v170 = vadd.f32 %v47, %v169
  %v171 = vpop.f32.mrb[0].mxu0
  %172 = vmatprep.mubr.f32.mxu0 0.0
  %173 = vmatmul.mubr.f32.gmra.mrb[0].mxu0 %v57
  %v174 = vpop.f32.mrb[0].mxu0
  %v175 = vadd.f32 %v47, %v174
  %v176 = vpop.f32.mrb[0].mxu0
  %177 = vmatprep.mubr.f32.mxu0 0.0
  %178 = vmatmul.mubr.f32.gmra.mrb[0].mxu0 %v60
  %v179 = vpop.f32.mrb[0].mxu0
  %v180 = vadd.f32 %v47, %v179
  %v181 = vpop.f32.mrb[0].mxu0
  %182 = vmatprep.mubr.f32.mxu0 0.0
  %183 = vmatmul.mubr.f32.gmra.mrb[0].mxu0 %v63
  %v184 = vpop.f32.mrb[0].mxu0
  %v185 = vadd.f32 %v47, %v184
  %v186 = vpop.f32.mrb[0].mxu0
  %187 = vmatprep.mubr.f32.mxu0 0.0
  %188 = vmatmul.mubr.f32.gmra.mrb[0].mxu0 %v66
  %v189 = vpop.f32.mrb[0].mxu0
  %v190 = vadd.f32 %v47, %v189
  %v191 = vpop.f32.mrb[0].mxu0
  %192 = vmatprep.mubr.f32.mxu0 0.0
  %193 = vmatmul.mubr.f32.gmra.mrb[0].mxu0 %v69
  %v194 = vpop.f32.mrb[0].mxu0
  %v195 = vadd.f32 %v47, %v194
  %v196 = vpop.f32.mrb[0].mxu0
  %197 = vmatprep.mubr.f32.mxu0 0.0
  %198 = vmatmul.mubr.f32.gmra.mrb[0].mxu0 %v72
  %v199 = vpop.f32.mrb[0].mxu0
  %v200 = vadd.f32 %v47, %v199
  %v201 = vpop.f32.mrb[0].mxu0
  %202 = vmatprep.mubr.f32.mxu0 0.0
  %203 = vmatmul.mubr.f32.gmra.mrb[0].mxu0 %v75
  %v204 = vpop.f32.mrb[0].mxu0
  %v205 = vadd.f32 %v47, %v204
  %v206 = vpop.f32.mrb[0].mxu0
  %207 = vmatprep.mubr.f32.mxu0 0.0
  %208 = vmatmul.mubr.f32.gmra.mrb[0].mxu0 %v78
  %v209 = vpop.f32.mrb[0].mxu0
  %v210 = vadd.f32 %v47, %v209
  %v211 = vpop.f32.mrb[0].mxu0
  %212 = vmatprep.mubr.f32.mxu0 0.0
  %213 = vmatmul.mubr.f32.gmra.mrb[0].mxu0 %v81
  %v214 = vpop.f32.mrb[0].mxu0
  %v215 = vadd.f32 %v47, %v214
  %v216 = vpop.f32.mrb[0].mxu0
  %217 = vmatprep.mubr.f32.mxu0 0.0
  %218 = vmatmul.mubr.f32.gmra.mrb[0].mxu0 %v84
  %v219 = vpop.f32.mrb[0].mxu0
  %v220 = vadd.f32 %v47, %v219
  %v221 = vpop.f32.mrb[0].mxu0
  %222 = vmatprep.mubr.f32.mxu0 0.0
  %223 = vmatmul.mubr.f32.gmra.mrb[0].mxu0 %v87
  %v224 = vpop.f32.mrb[0].mxu0
  %v225 = vadd.f32 %v47, %v224
  %v226 = vpop.f32.mrb[0].mxu0
  %227 = vmatprep.mubr.f32.mxu0 0.0
  %228 = vmatmul.mubr.f32.gmra.mrb[0].mxu0 %v90
  %v229 = vpop.f32.mrb[0].mxu0
  %v230 = vadd.f32 %v47, %v229
  %v231 = vpop.f32.mrb[0].mxu0
  %232 = vmatprep.mubr.f32.mxu0 0.0
  %233 = vmatmul.mubr.f32.gmra.mrb[0].mxu0 %v93
  %v234 = vpop.f32.mrb[0].mxu0
  %v235 = vadd.f32 %v47, %v234
  %v236 = vpop.f32.mrb[0].mxu0
  %237 = vmatprep.mubr.f32.mxu0 0.0
  %238 = vmatmul.mubr.f32.gmra.mrb[0].mxu0 %v96
  %v239 = vpop.f32.mrb[0].mxu0
  %v240 = vadd.f32 %v47, %v239
  %v241 = vpop.f32.mrb[0].mxu0
  %242 = vdwg.mxu0
  %v243 = vsel %vm49, %v165, 0.0
  %244 = vadd.xlane.f32.xlu0 %v243
  %v245 = vpop.xlane.xlu0 %244
  %v246 = vsel %vm49, %v170, 0.0
  %247 = vadd.xlane.f32.xlu0 %v246
  %v248 = vpop.xlane.xlu0 %247
  %v249 = vsel %vm49, %v175, 0.0
  %250 = vadd.xlane.f32.xlu0 %v249
  %v251 = vpop.xlane.xlu0 %250
  %v252 = vsel %vm49, %v180, 0.0
  %253 = vadd.xlane.f32.xlu0 %v252
  %v254 = vpop.xlane.xlu0 %253
  %v255 = vsel %vm49, %v185, 0.0
  %256 = vadd.xlane.f32.xlu0 %v255
  %v257 = vpop.xlane.xlu0 %256
  %v258 = vsel %vm49, %v190, 0.0
  %259 = vadd.xlane.f32.xlu0 %v258
  %v260 = vpop.xlane.xlu0 %259
  %v261 = vsel %vm49, %v195, 0.0
  %262 = vadd.xlane.f32.xlu0 %v261
  %v263 = vpop.xlane.xlu0 %262
  %v264 = vsel %vm49, %v200, 0.0
  %265 = vadd.xlane.f32.xlu0 %v264
  %v266 = vpop.xlane.xlu0 %265
  %v267 = vsel %vm49, %v205, 0.0
  %268 = vadd.xlane.f32.xlu0 %v267
  %v269 = vpop.xlane.xlu0 %268
  %v270 = vsel %vm49, %v210, 0.0
  %271 = vadd.xlane.f32.xlu0 %v270
  %v272 = vpop.xlane.xlu0 %271
  %v273 = vsel %vm49, %v215, 0.0
  %274 = vadd.xlane.f32.xlu0 %v273
  %v275 = vpop.xlane.xlu0 %274
  %v276 = vsel %vm49, %v220, 0.0
  %277 = vadd.xlane.f32.xlu0 %v276
  %v278 = vpop.xlane.xlu0 %277
  %v279 = vsel %vm49, %v225, 0.0
  %280 = vadd.xlane.f32.xlu0 %v279
  %v281 = vpop.xlane.xlu0 %280
  %v282 = vsel %vm49, %v230, 0.0
  %283 = vadd.xlane.f32.xlu0 %v282
  %v284 = vpop.xlane.xlu0 %283
  %v285 = vsel %vm49, %v235, 0.0
  %286 = vadd.xlane.f32.xlu0 %v285
  %v287 = vpop.xlane.xlu0 %286
  %v288 = vsel %vm49, %v240, 0.0
  %289 = vadd.xlane.f32.xlu0 %v288
  %v290 = vpop.xlane.xlu0 %289
  %v291 = vrcp.pop 32.0
  %v292 = vmul.f32 %v245, %v291
  %v293 = vmul.f32 %v248, %v291
  %v294 = vmul.f32 %v251, %v291
  %v295 = vmul.f32 %v254, %v291
  %v296 = vmul.f32 %v257, %v291
  %v297 = vmul.f32 %v260, %v291
  %v298 = vmul.f32 %v263, %v291
  %v299 = vmul.f32 %v266, %v291
  %v300 = vmul.f32 %v269, %v291
  %v301 = vmul.f32 %v272, %v291
  %v302 = vmul.f32 %v275, %v291
  %v303 = vmul.f32 %v278, %v291
  %v304 = vmul.f32 %v281, %v291
  %v305 = vmul.f32 %v284, %v291
  %v306 = vmul.f32 %v287, %v291
  %v307 = vmul.f32 %v290, %v291
  %v308 = vsub.f32 %v165, %v292
  %v309 = vsub.f32 %v170, %v293
  %v310 = vsub.f32 %v175, %v294
  %v311 = vsub.f32 %v180, %v295
  %v312 = vsub.f32 %v185, %v296
  %v313 = vsub.f32 %v190, %v297
  %v314 = vsub.f32 %v195, %v298
  %v315 = vsub.f32 %v200, %v299
  %v316 = vsub.f32 %v205, %v300
  %v317 = vsub.f32 %v210, %v301
  %v318 = vsub.f32 %v215, %v302
  %v319 = vsub.f32 %v220, %v303
  %v320 = vsub.f32 %v225, %v304
  %v321 = vsub.f32 %v230, %v305
  %v322 = vsub.f32 %v235, %v306
  %v323 = vsub.f32 %v240, %v307
  %v324 = vmul.f32 %v308, %v308
  %v325 = vmul.f32 %v309, %v309
  %v326 = vmul.f32 %v310, %v310
  %v327 = vmul.f32 %v311, %v311
  %v328 = vmul.f32 %v312, %v312
  %v329 = vmul.f32 %v313, %v313
  %v330 = vmul.f32 %v314, %v314
  %v331 = vmul.f32 %v315, %v315
  %v332 = vmul.f32 %v316, %v316
  %v333 = vmul.f32 %v317, %v317
  %v334 = vmul.f32 %v318, %v318
  %v335 = vmul.f32 %v319, %v319
  %v336 = vmul.f32 %v320, %v320
  %v337 = vmul.f32 %v321, %v321
  %v338 = vmul.f32 %v322, %v322
  %v339 = vmul.f32 %v323, %v323
  %v340 = vsel %vm49, %v324, 0.0
  %341 = vadd.xlane.f32.xlu0 %v340
  %v342 = vpop.xlane.xlu0 %341
  %v343 = vsel %vm49, %v325, 0.0
  %344 = vadd.xlane.f32.xlu0 %v343
  %v345 = vpop.xlane.xlu0 %344
  %v346 = vsel %vm49, %v326, 0.0
  %347 = vadd.xlane.f32.xlu0 %v346
  %v348 = vpop.xlane.xlu0 %347
  %v349 = vsel %vm49, %v327, 0.0
  %350 = vadd.xlane.f32.xlu0 %v349
  %v351 = vpop.xlane.xlu0 %350
  %v352 = vsel %vm49, %v328, 0.0
  %353 = vadd.xlane.f32.xlu0 %v352
  %v354 = vpop.xlane.xlu0 %353
  %v355 = vsel %vm49, %v329, 0.0
  %356 = vadd.xlane.f32.xlu0 %v355
  %v357 = vpop.xlane.xlu0 %356
  %v358 = vsel %vm49, %v330, 0.0
  %359 = vadd.xlane.f32.xlu0 %v358
  %v360 = vpop.xlane.xlu0 %359
  %v361 = vsel %vm49, %v331, 0.0
  %362 = vadd.xlane.f32.xlu0 %v361
  %v363 = vpop.xlane.xlu0 %362
  %v364 = vsel %vm49, %v332, 0.0
  %365 = vadd.xlane.f32.xlu0 %v364
  %v366 = vpop.xlane.xlu0 %365
  %v367 = vsel %vm49, %v333, 0.0
  %368 = vadd.xlane.f32.xlu0 %v367
  %v369 = vpop.xlane.xlu0 %368
  %v370 = vsel %vm49, %v334, 0.0
  %371 = vadd.xlane.f32.xlu0 %v370
  %v372 = vpop.xlane.xlu0 %371
  %v373 = vsel %vm49, %v335, 0.0
  %374 = vadd.xlane.f32.xlu0 %v373
  %v375 = vpop.xlane.xlu0 %374
  %v376 = vsel %vm49, %v336, 0.0
  %377 = vadd.xlane.f32.xlu0 %v376
  %v378 = vpop.xlane.xlu0 %377
  %v379 = vsel %vm49, %v337, 0.0
  %380 = vadd.xlane.f32.xlu0 %v379
  %v381 = vpop.xlane.xlu0 %380
  %v382 = vsel %vm49, %v338, 0.0
  %383 = vadd.xlane.f32.xlu0 %v382
  %v384 = vpop.xlane.xlu0 %383
  %v385 = vsel %vm49, %v339, 0.0
  %386 = vadd.xlane.f32.xlu0 %v385
  %v387 = vpop.xlane.xlu0 %386
  %v388 = vmul.f32 %v342, %v291
  %v389 = vmul.f32 %v345, %v291
  %v390 = vmul.f32 %v348, %v291
  %v391 = vmul.f32 %v351, %v291
  %v392 = vmul.f32 %v354, %v291
  %v393 = vmul.f32 %v357, %v291
  %v394 = vmul.f32 %v360, %v291
  %v395 = vmul.f32 %v363, %v291
  %v396 = vmul.f32 %v366, %v291
  %v397 = vmul.f32 %v369, %v291
  %v398 = vmul.f32 %v372, %v291
  %v399 = vmul.f32 %v375, %v291
  %v400 = vmul.f32 %v378, %v291
  %v401 = vmul.f32 %v381, %v291
  %v402 = vmul.f32 %v384, %v291
  %v403 = vmul.f32 %v387, %v291
  %v404 = vadd.f32 %v388, 1e-05
  %v405 = vadd.f32 %v389, 1e-05
  %v406 = vadd.f32 %v390, 1e-05
  %v407 = vadd.f32 %v391, 1e-05
  %v408 = vadd.f32 %v392, 1e-05
  %v409 = vadd.f32 %v393, 1e-05
  %v410 = vadd.f32 %v394, 1e-05
  %v411 = vadd.f32 %v395, 1e-05
  %v412 = vadd.f32 %v396, 1e-05
  %v413 = vadd.f32 %v397, 1e-05
  %v414 = vadd.f32 %v398, 1e-05
  %v415 = vadd.f32 %v399, 1e-05
  %v416 = vadd.f32 %v400, 1e-05
  %v417 = vadd.f32 %v401, 1e-05
  %v418 = vadd.f32 %v402, 1e-05
  %v419 = vadd.f32 %v403, 1e-05
  %v420 = vrsqrt.pop %v404
  %v421 = vrsqrt.pop %v405
  %v422 = vrsqrt.pop %v406
  %v423 = vrsqrt.pop %v407
  %v424 = vrsqrt.pop %v408
  %v425 = vrsqrt.pop %v409
  %v426 = vrsqrt.pop %v410
  %v427 = vrsqrt.pop %v411
  %v428 = vrsqrt.pop %v412
  %v429 = vrsqrt.pop %v413
  %v430 = vrsqrt.pop %v414
  %v431 = vrsqrt.pop %v415
  %v432 = vrsqrt.pop %v416
  %v433 = vrsqrt.pop %v417
  %v434 = vrsqrt.pop %v418
  %v435 = vrsqrt.pop %v419
  %v436 = vmul.f32 %v308, %v420
  %v437 = vmul.f32 %v309, %v421
  %v438 = vmul.f32 %v310, %v422
  %v439 = vmul.f32 %v311, %v423
  %v440 = vmul.f32 %v312, %v424
  %v441 = vmul.f32 %v313, %v425
  %v442 = vmul.f32 %v314, %v426
  %v443 = vmul.f32 %v315, %v427
  %v444 = vmul.f32 %v316, %v428
  %v445 = vmul.f32 %v317, %v429
  %v446 = vmul.f32 %v318, %v430
  %v447 = vmul.f32 %v319, %v431
  %v448 = vmul.f32 %v320, %v432
  %v449 = vmul.f32 %v321, %v433
  %v450 = vmul.f32 %v322, %v434
  %v451 = vmul.f32 %v323, %v435
  %v453 = vlaneseq
  %v454 = vshrl.u32 %v453, 7
  %v455 = vsub.s32 0, %v454
  %v456 = vrot.slane %v36, %v455
  %v458 = vmul.f32 %v436, %v456
  %v459 = vmul.f32 %v437, %v456
  %v460 = vmul.f32 %v438, %v456
  %v461 = vmul.f32 %v439, %v456
  %v462 = vmul.f32 %v440, %v456
  %v463 = vmul.f32 %v441, %v456
  %v464 = vmul.f32 %v442, %v456
  %v465 = vmul.f32 %v443, %v456
  %v466 = vmul.f32 %v444, %v456
  %v467 = vmul.f32 %v445, %v456
  %v468 = vmul.f32 %v446, %v456
  %v469 = vmul.f32 %v447, %v456
  %v470 = vmul.f32 %v448, %v456
  %v471 = vmul.f32 %v449, %v456
  %v472 = vmul.f32 %v450, %v456
  %v473 = vmul.f32 %v451, %v456
  %v475 = vlaneseq
  %v476 = vshrl.u32 %v475, 7
  %v477 = vsub.s32 0, %v476
  %v478 = vrot.slane %v37, %v477
  %v480 = vadd.f32 %v458, %v478
  %v481 = vadd.f32 %v459, %v478
  %v482 = vadd.f32 %v460, %v478
  %v483 = vadd.f32 %v461, %v478
  %v484 = vadd.f32 %v462, %v478
  %v485 = vadd.f32 %v463, %v478
  %v486 = vadd.f32 %v464, %v478
  %v487 = vadd.f32 %v465, %v478
  %v488 = vadd.f32 %v466, %v478
  %v489 = vadd.f32 %v467, %v478
  %v490 = vadd.f32 %v468, %v478
  %v491 = vadd.f32 %v469, %v478
  %v492 = vadd.f32 %v470, %v478
  %v493 = vadd.f32 %v471, %v478
  %v494 = vadd.f32 %v472, %v478
  %v495 = vadd.f32 %v473, %v478
  %496 = vst.msk [vmem:[%s5] sm:$0xff] %vm49, %v480
  %497 = vst.msk [vmem:[%s5 + $0x8] sm:$0xff] %vm49, %v481
  %498 = vst.msk [vmem:[%s5 + $0x10] sm:$0xff] %vm49, %v482
  %499 = vst.msk [vmem:[%s5 + $0x18] sm:$0xff] %vm49, %v483
  %500 = vst.msk [vmem:[%s5 + $0x20] sm:$0xff] %vm49, %v484
  %501 = vst.msk [vmem:[%s5 + $0x28] sm:$0xff] %vm49, %v485
  %502 = vst.msk [vmem:[%s5 + $0x30] sm:$0xff] %vm49, %v486
  %503 = vst.msk [vmem:[%s5 + $0x38] sm:$0xff] %vm49, %v487
  %504 = vst.msk [vmem:[%s5 + $0x40] sm:$0xff] %vm49, %v488
  %505 = vst.msk [vmem:[%s5 + $0x48] sm:$0xff] %vm49, %v489
  %506 = vst.msk [vmem:[%s5 + $0x50] sm:$0xff] %vm49, %v490
  %507 = vst.msk [vmem:[%s5 + $0x58] sm:$0xff] %vm49, %v491
  %508 = vst.msk [vmem:[%s5 + $0x60] sm:$0xff] %vm49, %v492
  %509 = vst.msk [vmem:[%s5 + $0x68] sm:$0xff] %vm49, %v493
  %510 = vst.msk [vmem:[%s5 + $0x70] sm:$0xff] %vm49, %v494
  %511 = vst.msk [vmem:[%s5 + $0x78] sm:$0xff] %vm49, %v495
  %s512 = scalar_lea.vmem %s1, 32
  %v513 = vld [vmem:[%s512] sm:$0xff]
  %v514 = vld [vmem:[%s512 + $0x8] sm:$0xff]
  %v515 = vld [vmem:[%s512 + $0x10] sm:$0xff]
  %v516 = vld [vmem:[%s512 + $0x18] sm:$0xff]
  %s517 = scalar_lea.vmem %s2, 1
  %v518 = vld [vmem:[%s517] sm:$0x1]
  %v520 = vlaneseq
  %v521 = vshrl.u32 %v520, 7
  %v522 = vsub.s32 0, %v521
  %v523 = vrot.slane %v518, %v522
  %525 = vmatprep.subr.mxu0 0.0
  %526 = vmatpush1.msra.mxu0 %v513
  %527 = vmatprep.subr.mxu0 0.0
  %528 = vmatpush1.msra.mxu0 %v514
  %529 = vmatprep.subr.mxu0 0.0
  %530 = vmatpush1.msra.mxu0 %v515
  %531 = vmatprep.subr.mxu0 0.0
  %532 = vmatpush1.msra.mxu0 %v516
  %533 = vmatprep.subr.mxu0 0.0
  %534 = vmatpush1.msra.mxu0 0.0
  %535 = vmatprep.subr.mxu0 0.0
  %536 = vmatpush1.msra.mxu0 0.0
  %537 = vmatprep.subr.mxu0 0.0
  %538 = vmatpush1.msra.mxu0 0.0
  %539 = vmatprep.subr.mxu0 0.0
  %540 = vmatpush1.msra.mxu0 0.0
  %541 = vmatprep.subr.mxu0 0.0
  %542 = vmatpush1.msra.mxu0 0.0
  %543 = vmatprep.subr.mxu0 0.0
  %544 = vmatpush1.msra.mxu0 0.0
  %545 = vmatprep.subr.mxu0 0.0
  %546 = vmatpush1.msra.mxu0 0.0
  %547 = vmatprep.subr.mxu0 0.0
  %548 = vmatpush1.msra.mxu0 0.0
  %549 = vmatprep.subr.mxu0 0.0
  %550 = vmatpush1.msra.mxu0 0.0
  %551 = vmatprep.subr.mxu0 0.0
  %552 = vmatpush1.msra.mxu0 0.0
  %553 = vmatprep.subr.mxu0 0.0
  %554 = vmatpush1.msra.mxu0 0.0
  %555 = vmatprep.subr.mxu0 0.0
  %556 = vmatpush1.msra.mxu0 0.0
  %557 = vmatprep.subr.mxu0 0.0
  %558 = vmatpush1.msra.mxu0 0.0
  %559 = vmatprep.subr.mxu0 0.0
  %560 = vmatpush1.msra.mxu0 0.0
  %561 = vmatprep.subr.mxu0 0.0
  %562 = vmatpush1.msra.mxu0 0.0
  %563 = vmatprep.subr.mxu0 0.0
  %564 = vmatpush1.msra.mxu0 0.0
  %565 = vmatprep.subr.mxu0 0.0
  %566 = vmatpush1.msra.mxu0 0.0
  %567 = vmatprep.subr.mxu0 0.0
  %568 = vmatpush1.msra.mxu0 0.0
  %569 = vmatprep.subr.mxu0 0.0
  %570 = vmatpush1.msra.mxu0 0.0
  %571 = vmatprep.subr.mxu0 0.0
  %572 = vmatpush1.msra.mxu0 0.0
  %573 = vmatprep.subr.mxu0 0.0
  %574 = vmatpush1.msra.mxu0 0.0
  %575 = vmatprep.subr.mxu0 0.0
  %576 = vmatpush1.msra.mxu0 0.0
  %577 = vmatprep.subr.mxu0 0.0
  %578 = vmatpush1.msra.mxu0 0.0
  %579 = vmatprep.subr.mxu0 0.0
  %580 = vmatpush1.msra.mxu0 0.0
  %581 = vmatprep.subr.mxu0 0.0
  %582 = vmatpush1.msra.mxu0 0.0
  %583 = vmatprep.subr.mxu0 0.0
  %584 = vmatpush1.msra.mxu0 0.0
  %585 = vmatprep.subr.mxu0 0.0
  %586 = vmatpush1.msra.mxu0 0.0
  %587 = vmatprep.subr.mxu0 0.0
  %588 = vmatpush1.msra.mxu0 0.0
  %589 = vmatprep.mubr.f32.mxu0 0.0
  %590 = vmatmul.mubr.f32.gmra.mrb[0].mxu0 %v51
  %v591 = vpop.f32.mrb[0].mxu0
  %v592 = vadd.f32 %v523, %v591
  %v593 = vpop.f32.mrb[0].mxu0
  %594 = vmatprep.mubr.f32.mxu0 0.0
  %595 = vmatmul.mubr.f32.gmra.mrb[0].mxu0 %v54
  %v596 = vpop.f32.mrb[0].mxu0
  %v597 = vadd.f32 %v523, %v596
  %v598 = vpop.f32.mrb[0].mxu0
  %599 = vmatprep.mubr.f32.mxu0 0.0
  %600 = vmatmul.mubr.f32.gmra.mrb[0].mxu0 %v57
  %v601 = vpop.f32.mrb[0].mxu0
  %v602 = vadd.f32 %v523, %v601
  %v603 = vpop.f32.mrb[0].mxu0
  %604 = vmatprep.mubr.f32.mxu0 0.0
  %605 = vmatmul.mubr.f32.gmra.mrb[0].mxu0 %v60
  %v606 = vpop.f32.mrb[0].mxu0
  %v607 = vadd.f32 %v523, %v606
  %v608 = vpop.f32.mrb[0].mxu0
  %609 = vmatprep.mubr.f32.mxu0 0.0
  %610 = vmatmul.mubr.f32.gmra.mrb[0].mxu0 %v63
  %v611 = vpop.f32.mrb[0].mxu0
  %v612 = vadd.f32 %v523, %v611
  %v613 = vpop.f32.mrb[0].mxu0
  %614 = vmatprep.mubr.f32.mxu0 0.0
  %615 = vmatmul.mubr.f32.gmra.mrb[0].mxu0 %v66
  %v616 = vpop.f32.mrb[0].mxu0
  %v617 = vadd.f32 %v523, %v616
  %v618 = vpop.f32.mrb[0].mxu0
  %619 = vmatprep.mubr.f32.mxu0 0.0
  %620 = vmatmul.mubr.f32.gmra.mrb[0].mxu0 %v69
  %v621 = vpop.f32.mrb[0].mxu0
  %v622 = vadd.f32 %v523, %v621
  %v623 = vpop.f32.mrb[0].mxu0
  %624 = vmatprep.mubr.f32.mxu0 0.0
  %625 = vmatmul.mubr.f32.gmra.mrb[0].mxu0 %v72
  %v626 = vpop.f32.mrb[0].mxu0
  %v627 = vadd.f32 %v523, %v626
  %v628 = vpop.f32.mrb[0].mxu0
  %629 = vmatprep.mubr.f32.mxu0 0.0
  %630 = vmatmul.mubr.f32.gmra.mrb[0].mxu0 %v75
  %v631 = vpop.f32.mrb[0].mxu0
  %v632 = vadd.f32 %v523, %v631
  %v633 = vpop.f32.mrb[0].mxu0
  %634 = vmatprep.mubr.f32.mxu0 0.0
  %635 = vmatmul.mubr.f32.gmra.mrb[0].mxu0 %v78
  %v636 = vpop.f32.mrb[0].mxu0
  %v637 = vadd.f32 %v523, %v636
  %v638 = vpop.f32.mrb[0].mxu0
  %639 = vmatprep.mubr.f32.mxu0 0.0
  %640 = vmatmul.mubr.f32.gmra.mrb[0].mxu0 %v81
  %v641 = vpop.f32.mrb[0].mxu0
  %v642 = vadd.f32 %v523, %v641
  %v643 = vpop.f32.mrb[0].mxu0
  %644 = vmatprep.mubr.f32.mxu0 0.0
  %645 = vmatmul.mubr.f32.gmra.mrb[0].mxu0 %v84
  %v646 = vpop.f32.mrb[0].mxu0
  %v647 = vadd.f32 %v523, %v646
  %v648 = vpop.f32.mrb[0].mxu0
  %649 = vmatprep.mubr.f32.mxu0 0.0
  %650 = vmatmul.mubr.f32.gmra.mrb[0].mxu0 %v87
  %v651 = vpop.f32.mrb[0].mxu0
  %v652 = vadd.f32 %v523, %v651
  %v653 = vpop.f32.mrb[0].mxu0
  %654 = vmatprep.mubr.f32.mxu0 0.0
  %655 = vmatmul.mubr.f32.gmra.mrb[0].mxu0 %v90
  %v656 = vpop.f32.mrb[0].mxu0
  %v657 = vadd.f32 %v523, %v656
  %v658 = vpop.f32.mrb[0].mxu0
  %659 = vmatprep.mubr.f32.mxu0 0.0
  %660 = vmatmul.mubr.f32.gmra.mrb[0].mxu0 %v93
  %v661 = vpop.f32.mrb[0].mxu0
  %v662 = vadd.f32 %v523, %v661
  %v663 = vpop.f32.mrb[0].mxu0
  %664 = vmatprep.mubr.f32.mxu0 0.0
  %665 = vmatmul.mubr.f32.gmra.mrb[0].mxu0 %v96
  %v666 = vpop.f32.mrb[0].mxu0
  %v667 = vadd.f32 %v523, %v666
  %v668 = vpop.f32.mrb[0].mxu0
  %669 = vdwg.mxu0
  %v670 = vsel %vm49, %v592, 0.0
  %671 = vadd.xlane.f32.xlu0 %v670
  %v672 = vpop.xlane.xlu0 %671
  %v673 = vsel %vm49, %v597, 0.0
  %674 = vadd.xlane.f32.xlu0 %v673
  %v675 = vpop.xlane.xlu0 %674
  %v676 = vsel %vm49, %v602, 0.0
  %677 = vadd.xlane.f32.xlu0 %v676
  %v678 = vpop.xlane.xlu0 %677
  %v679 = vsel %vm49, %v607, 0.0
  %680 = vadd.xlane.f32.xlu0 %v679
  %v681 = vpop.xlane.xlu0 %680
  %v682 = vsel %vm49, %v612, 0.0
  %683 = vadd.xlane.f32.xlu0 %v682
  %v684 = vpop.xlane.xlu0 %683
  %v685 = vsel %vm49, %v617, 0.0
  %686 = vadd.xlane.f32.xlu0 %v685
  %v687 = vpop.xlane.xlu0 %686
  %v688 = vsel %vm49, %v622, 0.0
  %689 = vadd.xlane.f32.xlu0 %v688
  %v690 = vpop.xlane.xlu0 %689
  %v691 = vsel %vm49, %v627, 0.0
  %692 = vadd.xlane.f32.xlu0 %v691
  %v693 = vpop.xlane.xlu0 %692
  %v694 = vsel %vm49, %v632, 0.0
  %695 = vadd.xlane.f32.xlu0 %v694
  %v696 = vpop.xlane.xlu0 %695
  %v697 = vsel %vm49, %v637, 0.0
  %698 = vadd.xlane.f32.xlu0 %v697
  %v699 = vpop.xlane.xlu0 %698
  %v700 = vsel %vm49, %v642, 0.0
  %701 = vadd.xlane.f32.xlu0 %v700
  %v702 = vpop.xlane.xlu0 %701
  %v703 = vsel %vm49, %v647, 0.0
  %704 = vadd.xlane.f32.xlu0 %v703
  %v705 = vpop.xlane.xlu0 %704
  %v706 = vsel %vm49, %v652, 0.0
  %707 = vadd.xlane.f32.xlu0 %v706
  %v708 = vpop.xlane.xlu0 %707
  %v709 = vsel %vm49, %v657, 0.0
  %710 = vadd.xlane.f32.xlu0 %v709
  %v711 = vpop.xlane.xlu0 %710
  %v712 = vsel %vm49, %v662, 0.0
  %713 = vadd.xlane.f32.xlu0 %v712
  %v714 = vpop.xlane.xlu0 %713
  %v715 = vsel %vm49, %v667, 0.0
  %716 = vadd.xlane.f32.xlu0 %v715
  %v717 = vpop.xlane.xlu0 %716
  %v718 = vmul.f32 %v672, %v291
  %v719 = vmul.f32 %v675, %v291
  %v720 = vmul.f32 %v678, %v291
  %v721 = vmul.f32 %v681, %v291
  %v722 = vmul.f32 %v684, %v291
  %v723 = vmul.f32 %v687, %v291
  %v724 = vmul.f32 %v690, %v291
  %v725 = vmul.f32 %v693, %v291
  %v726 = vmul.f32 %v696, %v291
  %v727 = vmul.f32 %v699, %v291
  %v728 = vmul.f32 %v702, %v291
  %v729 = vmul.f32 %v705, %v291
  %v730 = vmul.f32 %v708, %v291
  %v731 = vmul.f32 %v711, %v291
  %v732 = vmul.f32 %v714, %v291
  %v733 = vmul.f32 %v717, %v291
  %v734 = vsub.f32 %v592, %v718
  %v735 = vsub.f32 %v597, %v719
  %v736 = vsub.f32 %v602, %v720
  %v737 = vsub.f32 %v607, %v721
  %v738 = vsub.f32 %v612, %v722
  %v739 = vsub.f32 %v617, %v723
  %v740 = vsub.f32 %v622, %v724
  %v741 = vsub.f32 %v627, %v725
  %v742 = vsub.f32 %v632, %v726
  %v743 = vsub.f32 %v637, %v727
  %v744 = vsub.f32 %v642, %v728
  %v745 = vsub.f32 %v647, %v729
  %v746 = vsub.f32 %v652, %v730
  %v747 = vsub.f32 %v657, %v731
  %v748 = vsub.f32 %v662, %v732
  %v749 = vsub.f32 %v667, %v733
  %v750 = vmul.f32 %v734, %v734
  %v751 = vmul.f32 %v735, %v735
  %v752 = vmul.f32 %v736, %v736
  %v753 = vmul.f32 %v737, %v737
  %v754 = vmul.f32 %v738, %v738
  %v755 = vmul.f32 %v739, %v739
  %v756 = vmul.f32 %v740, %v740
  %v757 = vmul.f32 %v741, %v741
  %v758 = vmul.f32 %v742, %v742
  %v759 = vmul.f32 %v743, %v743
  %v760 = vmul.f32 %v744, %v744
  %v761 = vmul.f32 %v745, %v745
  %v762 = vmul.f32 %v746, %v746
  %v763 = vmul.f32 %v747, %v747
  %v764 = vmul.f32 %v748, %v748
  %v765 = vmul.f32 %v749, %v749
  %v766 = vsel %vm49, %v750, 0.0
  %767 = vadd.xlane.f32.xlu0 %v766
  %v768 = vpop.xlane.xlu0 %767
  %v769 = vsel %vm49, %v751, 0.0
  %770 = vadd.xlane.f32.xlu0 %v769
  %v771 = vpop.xlane.xlu0 %770
  %v772 = vsel %vm49, %v752, 0.0
  %773 = vadd.xlane.f32.xlu0 %v772
  %v774 = vpop.xlane.xlu0 %773
  %v775 = vsel %vm49, %v753, 0.0
  %776 = vadd.xlane.f32.xlu0 %v775
  %v777 = vpop.xlane.xlu0 %776
  %v778 = vsel %vm49, %v754, 0.0
  %779 = vadd.xlane.f32.xlu0 %v778
  %v780 = vpop.xlane.xlu0 %779
  %v781 = vsel %vm49, %v755, 0.0
  %782 = vadd.xlane.f32.xlu0 %v781
  %v783 = vpop.xlane.xlu0 %782
  %v784 = vsel %vm49, %v756, 0.0
  %785 = vadd.xlane.f32.xlu0 %v784
  %v786 = vpop.xlane.xlu0 %785
  %v787 = vsel %vm49, %v757, 0.0
  %788 = vadd.xlane.f32.xlu0 %v787
  %v789 = vpop.xlane.xlu0 %788
  %v790 = vsel %vm49, %v758, 0.0
  %791 = vadd.xlane.f32.xlu0 %v790
  %v792 = vpop.xlane.xlu0 %791
  %v793 = vsel %vm49, %v759, 0.0
  %794 = vadd.xlane.f32.xlu0 %v793
  %v795 = vpop.xlane.xlu0 %794
  %v796 = vsel %vm49, %v760, 0.0
  %797 = vadd.xlane.f32.xlu0 %v796
  %v798 = vpop.xlane.xlu0 %797
  %v799 = vsel %vm49, %v761, 0.0
  %800 = vadd.xlane.f32.xlu0 %v799
  %v801 = vpop.xlane.xlu0 %800
  %v802 = vsel %vm49, %v762, 0.0
  %803 = vadd.xlane.f32.xlu0 %v802
  %v804 = vpop.xlane.xlu0 %803
  %v805 = vsel %vm49, %v763, 0.0
  %806 = vadd.xlane.f32.xlu0 %v805
  %v807 = vpop.xlane.xlu0 %806
  %v808 = vsel %vm49, %v764, 0.0
  %809 = vadd.xlane.f32.xlu0 %v808
  %v810 = vpop.xlane.xlu0 %809
  %v811 = vsel %vm49, %v765, 0.0
  %812 = vadd.xlane.f32.xlu0 %v811
  %v813 = vpop.xlane.xlu0 %812
  %v814 = vmul.f32 %v768, %v291
  %v815 = vmul.f32 %v771, %v291
  %v816 = vmul.f32 %v774, %v291
  %v817 = vmul.f32 %v777, %v291
  %v818 = vmul.f32 %v780, %v291
  %v819 = vmul.f32 %v783, %v291
  %v820 = vmul.f32 %v786, %v291
  %v821 = vmul.f32 %v789, %v291
  %v822 = vmul.f32 %v792, %v291
  %v823 = vmul.f32 %v795, %v291
  %v824 = vmul.f32 %v798, %v291
  %v825 = vmul.f32 %v801, %v291
  %v826 = vmul.f32 %v804, %v291
  %v827 = vmul.f32 %v807, %v291
  %v828 = vmul.f32 %v810, %v291
  %v829 = vmul.f32 %v813, %v291
  %v830 = vadd.f32 %v814, 1e-05
  %v831 = vadd.f32 %v815, 1e-05
  %v832 = vadd.f32 %v816, 1e-05
  %v833 = vadd.f32 %v817, 1e-05
  %v834 = vadd.f32 %v818, 1e-05
  %v835 = vadd.f32 %v819, 1e-05
  %v836 = vadd.f32 %v820, 1e-05
  %v837 = vadd.f32 %v821, 1e-05
  %v838 = vadd.f32 %v822, 1e-05
  %v839 = vadd.f32 %v823, 1e-05
  %v840 = vadd.f32 %v824, 1e-05
  %v841 = vadd.f32 %v825, 1e-05
  %v842 = vadd.f32 %v826, 1e-05
  %v843 = vadd.f32 %v827, 1e-05
  %v844 = vadd.f32 %v828, 1e-05
  %v845 = vadd.f32 %v829, 1e-05
  %v846 = vrsqrt.pop %v830
  %v847 = vrsqrt.pop %v831
  %v848 = vrsqrt.pop %v832
  %v849 = vrsqrt.pop %v833
  %v850 = vrsqrt.pop %v834
  %v851 = vrsqrt.pop %v835
  %v852 = vrsqrt.pop %v836
  %v853 = vrsqrt.pop %v837
  %v854 = vrsqrt.pop %v838
  %v855 = vrsqrt.pop %v839
  %v856 = vrsqrt.pop %v840
  %v857 = vrsqrt.pop %v841
  %v858 = vrsqrt.pop %v842
  %v859 = vrsqrt.pop %v843
  %v860 = vrsqrt.pop %v844
  %v861 = vrsqrt.pop %v845
  %v862 = vmul.f32 %v734, %v846
  %v863 = vmul.f32 %v735, %v847
  %v864 = vmul.f32 %v736, %v848
  %v865 = vmul.f32 %v737, %v849
  %v866 = vmul.f32 %v738, %v850
  %v867 = vmul.f32 %v739, %v851
  %v868 = vmul.f32 %v740, %v852
  %v869 = vmul.f32 %v741, %v853
  %v870 = vmul.f32 %v742, %v854
  %v871 = vmul.f32 %v743, %v855
  %v872 = vmul.f32 %v744, %v856
  %v873 = vmul.f32 %v745, %v857
  %v874 = vmul.f32 %v746, %v858
  %v875 = vmul.f32 %v747, %v859
  %v876 = vmul.f32 %v748, %v860
  %v877 = vmul.f32 %v749, %v861
  %v878 = vmul.f32 %v862, %v456
  %v879 = vmul.f32 %v863, %v456
  %v880 = vmul.f32 %v864, %v456
  %v881 = vmul.f32 %v865, %v456
  %v882 = vmul.f32 %v866, %v456
  %v883 = vmul.f32 %v867, %v456
  %v884 = vmul.f32 %v868, %v456
  %v885 = vmul.f32 %v869, %v456
  %v886 = vmul.f32 %v870, %v456
  %v887 = vmul.f32 %v871, %v456
  %v888 = vmul.f32 %v872, %v456
  %v889 = vmul.f32 %v873, %v456
  %v890 = vmul.f32 %v874, %v456
  %v891 = vmul.f32 %v875, %v456
  %v892 = vmul.f32 %v876, %v456
  %v893 = vmul.f32 %v877, %v456
  %v894 = vadd.f32 %v878, %v478
  %v895 = vadd.f32 %v879, %v478
  %v896 = vadd.f32 %v880, %v478
  %v897 = vadd.f32 %v881, %v478
  %v898 = vadd.f32 %v882, %v478
  %v899 = vadd.f32 %v883, %v478
  %v900 = vadd.f32 %v884, %v478
  %v901 = vadd.f32 %v885, %v478
  %v902 = vadd.f32 %v886, %v478
  %v903 = vadd.f32 %v887, %v478
  %v904 = vadd.f32 %v888, %v478
  %v905 = vadd.f32 %v889, %v478
  %v906 = vadd.f32 %v890, %v478
  %v907 = vadd.f32 %v891, %v478
  %v908 = vadd.f32 %v892, %v478
  %v909 = vadd.f32 %v893, %v478
  %s910 = scalar_lea.vmem %s5, 128
  %911 = vst.msk [vmem:[%s910] sm:$0xff] %vm49, %v894
  %912 = vst.msk [vmem:[%s910 + $0x8] sm:$0xff] %vm49, %v895
  %913 = vst.msk [vmem:[%s910 + $0x10] sm:$0xff] %vm49, %v896
  %914 = vst.msk [vmem:[%s910 + $0x18] sm:$0xff] %vm49, %v897
  %915 = vst.msk [vmem:[%s910 + $0x20] sm:$0xff] %vm49, %v898
  %916 = vst.msk [vmem:[%s910 + $0x28] sm:$0xff] %vm49, %v899
  %917 = vst.msk [vmem:[%s910 + $0x30] sm:$0xff] %vm49, %v900
  %918 = vst.msk [vmem:[%s910 + $0x38] sm:$0xff] %vm49, %v901
  %919 = vst.msk [vmem:[%s910 + $0x40] sm:$0xff] %vm49, %v902
  %920 = vst.msk [vmem:[%s910 + $0x48] sm:$0xff] %vm49, %v903
  %921 = vst.msk [vmem:[%s910 + $0x50] sm:$0xff] %vm49, %v904
  %922 = vst.msk [vmem:[%s910 + $0x58] sm:$0xff] %vm49, %v905
  %923 = vst.msk [vmem:[%s910 + $0x60] sm:$0xff] %vm49, %v906
  %924 = vst.msk [vmem:[%s910 + $0x68] sm:$0xff] %vm49, %v907
  %925 = vst.msk [vmem:[%s910 + $0x70] sm:$0xff] %vm49, %v908
  %926 = vst.msk [vmem:[%s910 + $0x78] sm:$0xff] %vm49, %v909
  %s927 = scalar_lea.vmem %s1, 64
  %v928 = vld [vmem:[%s927] sm:$0xff]
  %v929 = vld [vmem:[%s927 + $0x8] sm:$0xff]
  %v930 = vld [vmem:[%s927 + $0x10] sm:$0xff]
  %v931 = vld [vmem:[%s927 + $0x18] sm:$0xff]
  %s932 = scalar_lea.vmem %s2, 2
  %v933 = vld [vmem:[%s932] sm:$0x1]
  %v935 = vlaneseq
  %v936 = vshrl.u32 %v935, 7
  %v937 = vsub.s32 0, %v936
  %v938 = vrot.slane %v933, %v937
  %940 = vmatprep.subr.mxu0 0.0
  %941 = vmatpush1.msra.mxu0 %v928
  %942 = vmatprep.subr.mxu0 0.0
  %943 = vmatpush1.msra.mxu0 %v929
  %944 = vmatprep.subr.mxu0 0.0
  %945 = vmatpush1.msra.mxu0 %v930
  %946 = vmatprep.subr.mxu0 0.0
  %947 = vmatpush1.msra.mxu0 %v931
  %948 = vmatprep.subr.mxu0 0.0
  %949 = vmatpush1.msra.mxu0 0.0
  %950 = vmatprep.subr.mxu0 0.0
  %951 = vmatpush1.msra.mxu0 0.0
  %952 = vmatprep.subr.mxu0 0.0
  %953 = vmatpush1.msra.mxu0 0.0
  %954 = vmatprep.subr.mxu0 0.0
  %955 = vmatpush1.msra.mxu0 0.0
  %956 = vmatprep.subr.mxu0 0.0
  %957 = vmatpush1.msra.mxu0 0.0
  %958 = vmatprep.subr.mxu0 0.0
  %959 = vmatpush1.msra.mxu0 0.0
  %960 = vmatprep.subr.mxu0 0.0
  %961 = vmatpush1.msra.mxu0 0.0
  %962 = vmatprep.subr.mxu0 0.0
  %963 = vmatpush1.msra.mxu0 0.0
  %964 = vmatprep.subr.mxu0 0.0
  %965 = vmatpush1.msra.mxu0 0.0
  %966 = vmatprep.subr.mxu0 0.0
  %967 = vmatpush1.msra.mxu0 0.0
  %968 = vmatprep.subr.mxu0 0.0
  %969 = vmatpush1.msra.mxu0 0.0
  %970 = vmatprep.subr.mxu0 0.0
  %971 = vmatpush1.msra.mxu0 0.0
  %972 = vmatprep.subr.mxu0 0.0
  %973 = vmatpush1.msra.mxu0 0.0
  %974 = vmatprep.subr.mxu0 0.0
  %975 = vmatpush1.msra.mxu0 0.0
  %976 = vmatprep.subr.mxu0 0.0
  %977 = vmatpush1.msra.mxu0 0.0
  %978 = vmatprep.subr.mxu0 0.0
  %979 = vmatpush1.msra.mxu0 0.0
  %980 = vmatprep.subr.mxu0 0.0
  %981 = vmatpush1.msra.mxu0 0.0
  %982 = vmatprep.subr.mxu0 0.0
  %983 = vmatpush1.msra.mxu0 0.0
  %984 = vmatprep.subr.mxu0 0.0
  %985 = vmatpush1.msra.mxu0 0.0
  %986 = vmatprep.subr.mxu0 0.0
  %987 = vmatpush1.msra.mxu0 0.0
  %988 = vmatprep.subr.mxu0 0.0
  %989 = vmatpush1.msra.mxu0 0.0
  %990 = vmatprep.subr.mxu0 0.0
  %991 = vmatpush1.msra.mxu0 0.0
  %992 = vmatprep.subr.mxu0 0.0
  %993 = vmatpush1.msra.mxu0 0.0
  %994 = vmatprep.subr.mxu0 0.0
  %995 = vmatpush1.msra.mxu0 0.0
  %996 = vmatprep.subr.mxu0 0.0
  %997 = vmatpush1.msra.mxu0 0.0
  %998 = vmatprep.subr.mxu0 0.0
  %999 = vmatpush1.msra.mxu0 0.0
  %1000 = vmatprep.subr.mxu0 0.0
  %1001 = vmatpush1.msra.mxu0 0.0
  %1002 = vmatprep.subr.mxu0 0.0
  %1003 = vmatpush1.msra.mxu0 0.0
  %1004 = vmatprep.mubr.f32.mxu0 0.0
  %1005 = vmatmul.mubr.f32.gmra.mrb[0].mxu0 %v51
  %v1006 = vpop.f32.mrb[0].mxu0
  %v1007 = vadd.f32 %v938, %v1006
  %v1008 = vpop.f32.mrb[0].mxu0
  %1009 = vmatprep.mubr.f32.mxu0 0.0
  %1010 = vmatmul.mubr.f32.gmra.mrb[0].mxu0 %v54
  %v1011 = vpop.f32.mrb[0].mxu0
  %v1012 = vadd.f32 %v938, %v1011
  %v1013 = vpop.f32.mrb[0].mxu0
  %1014 = vmatprep.mubr.f32.mxu0 0.0
  %1015 = vmatmul.mubr.f32.gmra.mrb[0].mxu0 %v57
  %v1016 = vpop.f32.mrb[0].mxu0
  %v1017 = vadd.f32 %v938, %v1016
  %v1018 = vpop.f32.mrb[0].mxu0
  %1019 = vmatprep.mubr.f32.mxu0 0.0
  %1020 = vmatmul.mubr.f32.gmra.mrb[0].mxu0 %v60
  %v1021 = vpop.f32.mrb[0].mxu0
  %v1022 = vadd.f32 %v938, %v1021
  %v1023 = vpop.f32.mrb[0].mxu0
  %1024 = vmatprep.mubr.f32.mxu0 0.0
  %1025 = vmatmul.mubr.f32.gmra.mrb[0].mxu0 %v63
  %v1026 = vpop.f32.mrb[0].mxu0
  %v1027 = vadd.f32 %v938, %v1026
  %v1028 = vpop.f32.mrb[0].mxu0
  %1029 = vmatprep.mubr.f32.mxu0 0.0
  %1030 = vmatmul.mubr.f32.gmra.mrb[0].mxu0 %v66
  %v1031 = vpop.f32.mrb[0].mxu0
  %v1032 = vadd.f32 %v938, %v1031
  %v1033 = vpop.f32.mrb[0].mxu0
  %1034 = vmatprep.mubr.f32.mxu0 0.0
  %1035 = vmatmul.mubr.f32.gmra.mrb[0].mxu0 %v69
  %v1036 = vpop.f32.mrb[0].mxu0
  %v1037 = vadd.f32 %v938, %v1036
  %v1038 = vpop.f32.mrb[0].mxu0
  %1039 = vmatprep.mubr.f32.mxu0 0.0
  %1040 = vmatmul.mubr.f32.gmra.mrb[0].mxu0 %v72
  %v1041 = vpop.f32.mrb[0].mxu0
  %v1042 = vadd.f32 %v938, %v1041
  %v1043 = vpop.f32.mrb[0].mxu0
  %1044 = vmatprep.mubr.f32.mxu0 0.0
  %1045 = vmatmul.mubr.f32.gmra.mrb[0].mxu0 %v75
  %v1046 = vpop.f32.mrb[0].mxu0
  %v1047 = vadd.f32 %v938, %v1046
  %v1048 = vpop.f32.mrb[0].mxu0
  %1049 = vmatprep.mubr.f32.mxu0 0.0
  %1050 = vmatmul.mubr.f32.gmra.mrb[0].mxu0 %v78
  %v1051 = vpop.f32.mrb[0].mxu0
  %v1052 = vadd.f32 %v938, %v1051
  %v1053 = vpop.f32.mrb[0].mxu0
  %1054 = vmatprep.mubr.f32.mxu0 0.0
  %1055 = vmatmul.mubr.f32.gmra.mrb[0].mxu0 %v81
  %v1056 = vpop.f32.mrb[0].mxu0
  %v1057 = vadd.f32 %v938, %v1056
  %v1058 = vpop.f32.mrb[0].mxu0
  %1059 = vmatprep.mubr.f32.mxu0 0.0
  %1060 = vmatmul.mubr.f32.gmra.mrb[0].mxu0 %v84
  %v1061 = vpop.f32.mrb[0].mxu0
  %v1062 = vadd.f32 %v938, %v1061
  %v1063 = vpop.f32.mrb[0].mxu0
  %1064 = vmatprep.mubr.f32.mxu0 0.0
  %1065 = vmatmul.mubr.f32.gmra.mrb[0].mxu0 %v87
  %v1066 = vpop.f32.mrb[0].mxu0
  %v1067 = vadd.f32 %v938, %v1066
  %v1068 = vpop.f32.mrb[0].mxu0
  %1069 = vmatprep.mubr.f32.mxu0 0.0
  %1070 = vmatmul.mubr.f32.gmra.mrb[0].mxu0 %v90
  %v1071 = vpop.f32.mrb[0].mxu0
  %v1072 = vadd.f32 %v938, %v1071
  %v1073 = vpop.f32.mrb[0].mxu0
  %1074 = vmatprep.mubr.f32.mxu0 0.0
  %1075 = vmatmul.mubr.f32.gmra.mrb[0].mxu0 %v93
  %v1076 = vpop.f32.mrb[0].mxu0
  %v1077 = vadd.f32 %v938, %v1076
  %v1078 = vpop.f32.mrb[0].mxu0
  %1079 = vmatprep.mubr.f32.mxu0 0.0
  %1080 = vmatmul.mubr.f32.gmra.mrb[0].mxu0 %v96
  %v1081 = vpop.f32.mrb[0].mxu0
  %v1082 = vadd.f32 %v938, %v1081
  %v1083 = vpop.f32.mrb[0].mxu0
  %1084 = vdwg.mxu0
  %v1085 = vsel %vm49, %v1007, 0.0
  %1086 = vadd.xlane.f32.xlu0 %v1085
  %v1087 = vpop.xlane.xlu0 %1086
  %v1088 = vsel %vm49, %v1012, 0.0
  %1089 = vadd.xlane.f32.xlu0 %v1088
  %v1090 = vpop.xlane.xlu0 %1089
  %v1091 = vsel %vm49, %v1017, 0.0
  %1092 = vadd.xlane.f32.xlu0 %v1091
  %v1093 = vpop.xlane.xlu0 %1092
  %v1094 = vsel %vm49, %v1022, 0.0
  %1095 = vadd.xlane.f32.xlu0 %v1094
  %v1096 = vpop.xlane.xlu0 %1095
  %v1097 = vsel %vm49, %v1027, 0.0
  %1098 = vadd.xlane.f32.xlu0 %v1097
  %v1099 = vpop.xlane.xlu0 %1098
  %v1100 = vsel %vm49, %v1032, 0.0
  %1101 = vadd.xlane.f32.xlu0 %v1100
  %v1102 = vpop.xlane.xlu0 %1101
  %v1103 = vsel %vm49, %v1037, 0.0
  %1104 = vadd.xlane.f32.xlu0 %v1103
  %v1105 = vpop.xlane.xlu0 %1104
  %v1106 = vsel %vm49, %v1042, 0.0
  %1107 = vadd.xlane.f32.xlu0 %v1106
  %v1108 = vpop.xlane.xlu0 %1107
  %v1109 = vsel %vm49, %v1047, 0.0
  %1110 = vadd.xlane.f32.xlu0 %v1109
  %v1111 = vpop.xlane.xlu0 %1110
  %v1112 = vsel %vm49, %v1052, 0.0
  %1113 = vadd.xlane.f32.xlu0 %v1112
  %v1114 = vpop.xlane.xlu0 %1113
  %v1115 = vsel %vm49, %v1057, 0.0
  %1116 = vadd.xlane.f32.xlu0 %v1115
  %v1117 = vpop.xlane.xlu0 %1116
  %v1118 = vsel %vm49, %v1062, 0.0
  %1119 = vadd.xlane.f32.xlu0 %v1118
  %v1120 = vpop.xlane.xlu0 %1119
  %v1121 = vsel %vm49, %v1067, 0.0
  %1122 = vadd.xlane.f32.xlu0 %v1121
  %v1123 = vpop.xlane.xlu0 %1122
  %v1124 = vsel %vm49, %v1072, 0.0
  %1125 = vadd.xlane.f32.xlu0 %v1124
  %v1126 = vpop.xlane.xlu0 %1125
  %v1127 = vsel %vm49, %v1077, 0.0
  %1128 = vadd.xlane.f32.xlu0 %v1127
  %v1129 = vpop.xlane.xlu0 %1128
  %v1130 = vsel %vm49, %v1082, 0.0
  %1131 = vadd.xlane.f32.xlu0 %v1130
  %v1132 = vpop.xlane.xlu0 %1131
  %v1133 = vmul.f32 %v1087, %v291
  %v1134 = vmul.f32 %v1090, %v291
  %v1135 = vmul.f32 %v1093, %v291
  %v1136 = vmul.f32 %v1096, %v291
  %v1137 = vmul.f32 %v1099, %v291
  %v1138 = vmul.f32 %v1102, %v291
  %v1139 = vmul.f32 %v1105, %v291
  %v1140 = vmul.f32 %v1108, %v291
  %v1141 = vmul.f32 %v1111, %v291
  %v1142 = vmul.f32 %v1114, %v291
  %v1143 = vmul.f32 %v1117, %v291
  %v1144 = vmul.f32 %v1120, %v291
  %v1145 = vmul.f32 %v1123, %v291
  %v1146 = vmul.f32 %v1126, %v291
  %v1147 = vmul.f32 %v1129, %v291
  %v1148 = vmul.f32 %v1132, %v291
  %v1149 = vsub.f32 %v1007, %v1133
  %v1150 = vsub.f32 %v1012, %v1134
  %v1151 = vsub.f32 %v1017, %v1135
  %v1152 = vsub.f32 %v1022, %v1136
  %v1153 = vsub.f32 %v1027, %v1137
  %v1154 = vsub.f32 %v1032, %v1138
  %v1155 = vsub.f32 %v1037, %v1139
  %v1156 = vsub.f32 %v1042, %v1140
  %v1157 = vsub.f32 %v1047, %v1141
  %v1158 = vsub.f32 %v1052, %v1142
  %v1159 = vsub.f32 %v1057, %v1143
  %v1160 = vsub.f32 %v1062, %v1144
  %v1161 = vsub.f32 %v1067, %v1145
  %v1162 = vsub.f32 %v1072, %v1146
  %v1163 = vsub.f32 %v1077, %v1147
  %v1164 = vsub.f32 %v1082, %v1148
  %v1165 = vmul.f32 %v1149, %v1149
  %v1166 = vmul.f32 %v1150, %v1150
  %v1167 = vmul.f32 %v1151, %v1151
  %v1168 = vmul.f32 %v1152, %v1152
  %v1169 = vmul.f32 %v1153, %v1153
  %v1170 = vmul.f32 %v1154, %v1154
  %v1171 = vmul.f32 %v1155, %v1155
  %v1172 = vmul.f32 %v1156, %v1156
  %v1173 = vmul.f32 %v1157, %v1157
  %v1174 = vmul.f32 %v1158, %v1158
  %v1175 = vmul.f32 %v1159, %v1159
  %v1176 = vmul.f32 %v1160, %v1160
  %v1177 = vmul.f32 %v1161, %v1161
  %v1178 = vmul.f32 %v1162, %v1162
  %v1179 = vmul.f32 %v1163, %v1163
  %v1180 = vmul.f32 %v1164, %v1164
  %v1181 = vsel %vm49, %v1165, 0.0
  %1182 = vadd.xlane.f32.xlu0 %v1181
  %v1183 = vpop.xlane.xlu0 %1182
  %v1184 = vsel %vm49, %v1166, 0.0
  %1185 = vadd.xlane.f32.xlu0 %v1184
  %v1186 = vpop.xlane.xlu0 %1185
  %v1187 = vsel %vm49, %v1167, 0.0
  %1188 = vadd.xlane.f32.xlu0 %v1187
  %v1189 = vpop.xlane.xlu0 %1188
  %v1190 = vsel %vm49, %v1168, 0.0
  %1191 = vadd.xlane.f32.xlu0 %v1190
  %v1192 = vpop.xlane.xlu0 %1191
  %v1193 = vsel %vm49, %v1169, 0.0
  %1194 = vadd.xlane.f32.xlu0 %v1193
  %v1195 = vpop.xlane.xlu0 %1194
  %v1196 = vsel %vm49, %v1170, 0.0
  %1197 = vadd.xlane.f32.xlu0 %v1196
  %v1198 = vpop.xlane.xlu0 %1197
  %v1199 = vsel %vm49, %v1171, 0.0
  %1200 = vadd.xlane.f32.xlu0 %v1199
  %v1201 = vpop.xlane.xlu0 %1200
  %v1202 = vsel %vm49, %v1172, 0.0
  %1203 = vadd.xlane.f32.xlu0 %v1202
  %v1204 = vpop.xlane.xlu0 %1203
  %v1205 = vsel %vm49, %v1173, 0.0
  %1206 = vadd.xlane.f32.xlu0 %v1205
  %v1207 = vpop.xlane.xlu0 %1206
  %v1208 = vsel %vm49, %v1174, 0.0
  %1209 = vadd.xlane.f32.xlu0 %v1208
  %v1210 = vpop.xlane.xlu0 %1209
  %v1211 = vsel %vm49, %v1175, 0.0
  %1212 = vadd.xlane.f32.xlu0 %v1211
  %v1213 = vpop.xlane.xlu0 %1212
  %v1214 = vsel %vm49, %v1176, 0.0
  %1215 = vadd.xlane.f32.xlu0 %v1214
  %v1216 = vpop.xlane.xlu0 %1215
  %v1217 = vsel %vm49, %v1177, 0.0
  %1218 = vadd.xlane.f32.xlu0 %v1217
  %v1219 = vpop.xlane.xlu0 %1218
  %v1220 = vsel %vm49, %v1178, 0.0
  %1221 = vadd.xlane.f32.xlu0 %v1220
  %v1222 = vpop.xlane.xlu0 %1221
  %v1223 = vsel %vm49, %v1179, 0.0
  %1224 = vadd.xlane.f32.xlu0 %v1223
  %v1225 = vpop.xlane.xlu0 %1224
  %v1226 = vsel %vm49, %v1180, 0.0
  %1227 = vadd.xlane.f32.xlu0 %v1226
  %v1228 = vpop.xlane.xlu0 %1227
  %v1229 = vmul.f32 %v1183, %v291
  %v1230 = vmul.f32 %v1186, %v291
  %v1231 = vmul.f32 %v1189, %v291
  %v1232 = vmul.f32 %v1192, %v291
  %v1233 = vmul.f32 %v1195, %v291
  %v1234 = vmul.f32 %v1198, %v291
  %v1235 = vmul.f32 %v1201, %v291
  %v1236 = vmul.f32 %v1204, %v291
  %v1237 = vmul.f32 %v1207, %v291
  %v1238 = vmul.f32 %v1210, %v291
  %v1239 = vmul.f32 %v1213, %v291
  %v1240 = vmul.f32 %v1216, %v291
  %v1241 = vmul.f32 %v1219, %v291
  %v1242 = vmul.f32 %v1222, %v291
  %v1243 = vmul.f32 %v1225, %v291
  %v1244 = vmul.f32 %v1228, %v291
  %v1245 = vadd.f32 %v1229, 1e-05
  %v1246 = vadd.f32 %v1230, 1e-05
  %v1247 = vadd.f32 %v1231, 1e-05
  %v1248 = vadd.f32 %v1232, 1e-05
  %v1249 = vadd.f32 %v1233, 1e-05
  %v1250 = vadd.f32 %v1234, 1e-05
  %v1251 = vadd.f32 %v1235, 1e-05
  %v1252 = vadd.f32 %v1236, 1e-05
  %v1253 = vadd.f32 %v1237, 1e-05
  %v1254 = vadd.f32 %v1238, 1e-05
  %v1255 = vadd.f32 %v1239, 1e-05
  %v1256 = vadd.f32 %v1240, 1e-05
  %v1257 = vadd.f32 %v1241, 1e-05
  %v1258 = vadd.f32 %v1242, 1e-05
  %v1259 = vadd.f32 %v1243, 1e-05
  %v1260 = vadd.f32 %v1244, 1e-05
  %v1261 = vrsqrt.pop %v1245
  %v1262 = vrsqrt.pop %v1246
  %v1263 = vrsqrt.pop %v1247
  %v1264 = vrsqrt.pop %v1248
  %v1265 = vrsqrt.pop %v1249
  %v1266 = vrsqrt.pop %v1250
  %v1267 = vrsqrt.pop %v1251
  %v1268 = vrsqrt.pop %v1252
  %v1269 = vrsqrt.pop %v1253
  %v1270 = vrsqrt.pop %v1254
  %v1271 = vrsqrt.pop %v1255
  %v1272 = vrsqrt.pop %v1256
  %v1273 = vrsqrt.pop %v1257
  %v1274 = vrsqrt.pop %v1258
  %v1275 = vrsqrt.pop %v1259
  %v1276 = vrsqrt.pop %v1260
  %v1277 = vmul.f32 %v1149, %v1261
  %v1278 = vmul.f32 %v1150, %v1262
  %v1279 = vmul.f32 %v1151, %v1263
  %v1280 = vmul.f32 %v1152, %v1264
  %v1281 = vmul.f32 %v1153, %v1265
  %v1282 = vmul.f32 %v1154, %v1266
  %v1283 = vmul.f32 %v1155, %v1267
  %v1284 = vmul.f32 %v1156, %v1268
  %v1285 = vmul.f32 %v1157, %v1269
  %v1286 = vmul.f32 %v1158, %v1270
  %v1287 = vmul.f32 %v1159, %v1271
  %v1288 = vmul.f32 %v1160, %v1272
  %v1289 = vmul.f32 %v1161, %v1273
  %v1290 = vmul.f32 %v1162, %v1274
  %v1291 = vmul.f32 %v1163, %v1275
  %v1292 = vmul.f32 %v1164, %v1276
  %v1293 = vmul.f32 %v1277, %v456
  %v1294 = vmul.f32 %v1278, %v456
  %v1295 = vmul.f32 %v1279, %v456
  %v1296 = vmul.f32 %v1280, %v456
  %v1297 = vmul.f32 %v1281, %v456
  %v1298 = vmul.f32 %v1282, %v456
  %v1299 = vmul.f32 %v1283, %v456
  %v1300 = vmul.f32 %v1284, %v456
  %v1301 = vmul.f32 %v1285, %v456
  %v1302 = vmul.f32 %v1286, %v456
  %v1303 = vmul.f32 %v1287, %v456
  %v1304 = vmul.f32 %v1288, %v456
  %v1305 = vmul.f32 %v1289, %v456
  %v1306 = vmul.f32 %v1290, %v456
  %v1307 = vmul.f32 %v1291, %v456
  %v1308 = vmul.f32 %v1292, %v456
  %v1309 = vadd.f32 %v1293, %v478
  %v1310 = vadd.f32 %v1294, %v478
  %v1311 = vadd.f32 %v1295, %v478
  %v1312 = vadd.f32 %v1296, %v478
  %v1313 = vadd.f32 %v1297, %v478
  %v1314 = vadd.f32 %v1298, %v478
  %v1315 = vadd.f32 %v1299, %v478
  %v1316 = vadd.f32 %v1300, %v478
  %v1317 = vadd.f32 %v1301, %v478
  %v1318 = vadd.f32 %v1302, %v478
  %v1319 = vadd.f32 %v1303, %v478
  %v1320 = vadd.f32 %v1304, %v478
  %v1321 = vadd.f32 %v1305, %v478
  %v1322 = vadd.f32 %v1306, %v478
  %v1323 = vadd.f32 %v1307, %v478
  %v1324 = vadd.f32 %v1308, %v478
  %s1325 = scalar_lea.vmem %s5, 256
  %1326 = vst.msk [vmem:[%s1325] sm:$0xff] %vm49, %v1309
  %1327 = vst.msk [vmem:[%s1325 + $0x8] sm:$0xff] %vm49, %v1310
  %1328 = vst.msk [vmem:[%s1325 + $0x10] sm:$0xff] %vm49, %v1311
  %1329 = vst.msk [vmem:[%s1325 + $0x18] sm:$0xff] %vm49, %v1312
  %1330 = vst.msk [vmem:[%s1325 + $0x20] sm:$0xff] %vm49, %v1313
  %1331 = vst.msk [vmem:[%s1325 + $0x28] sm:$0xff] %vm49, %v1314
  %1332 = vst.msk [vmem:[%s1325 + $0x30] sm:$0xff] %vm49, %v1315
  %1333 = vst.msk [vmem:[%s1325 + $0x38] sm:$0xff] %vm49, %v1316
  %1334 = vst.msk [vmem:[%s1325 + $0x40] sm:$0xff] %vm49, %v1317
  %1335 = vst.msk [vmem:[%s1325 + $0x48] sm:$0xff] %vm49, %v1318
  %1336 = vst.msk [vmem:[%s1325 + $0x50] sm:$0xff] %vm49, %v1319
  %1337 = vst.msk [vmem:[%s1325 + $0x58] sm:$0xff] %vm49, %v1320
  %1338 = vst.msk [vmem:[%s1325 + $0x60] sm:$0xff] %vm49, %v1321
  %1339 = vst.msk [vmem:[%s1325 + $0x68] sm:$0xff] %vm49, %v1322
  %1340 = vst.msk [vmem:[%s1325 + $0x70] sm:$0xff] %vm49, %v1323
  %1341 = vst.msk [vmem:[%s1325 + $0x78] sm:$0xff] %vm49, %v1324
  // Predicated region
  $region22: #{tpu_custom_call.1} parent=0 // pred_check
    _
  $region23: #{tpu_custom_call.1} parent=0 // pred_check_branch
    %1343 = sbr.rel (0) target = $region25
  $region24: #{tpu_custom_call.1} parent=0 // pred_region
    _
  $region25: #{tpu_custom_call.1} parent=0 // pred_fallthru
    _
  // Predicated region
  $region26: #{tpu_custom_call.1} parent=0 // pred_check
    _
  $region27: #{tpu_custom_call.1} parent=0 // pred_check_branch
    %1345 = sbr.rel (0) target = $region29
  $region28: #{tpu_custom_call.1} parent=0 // pred_region
    _
  $region29: #{tpu_custom_call.1} parent=0 // pred_fallthru
    _

</llo_original>
